<compile_context>
chip_gen: v6e
topology: v6e:2x2x1
jax: 0.10.0
libtpu: 0.0.40
codegen_flags: <defaults>
</compile_context>

<pallas_src>
import math
from functools import partial

import jax
import jax.numpy as jnp
from jax.experimental import pallas as pl
from jax.experimental.pallas import tpu as pltpu


# ----------------------------------------------------------------------------
# helpers (usable both inside the kernel and in the pure-JAX reference)
# ----------------------------------------------------------------------------
def _gelu_erf(x):
    # Exact (erf-based) GELU semantics via Abramowitz & Stegun 7.1.26
    # rational approximation (max abs err ~1.5e-7) -> only exp() needed (EUP).
    z = x * (1.0 / math.sqrt(2.0))
    sgn = jnp.where(z >= 0.0, 1.0, -1.0)
    a = jnp.abs(z)
    t = 1.0 / (1.0 + 0.3275911 * a)
    poly = t * (0.254829592
                + t * (-0.284496736
                       + t * (1.421413741
                              + t * (-1.453152027
                                     + t * 1.061405429))))
    erf = sgn * (1.0 - poly * jnp.exp(-a * a))
    return 0.5 * x * (1.0 + erf)


def _layernorm(v, w, b, eps=1e-5):
    mu = jnp.mean(v, axis=-1, keepdims=True)
    var = jnp.mean((v - mu) ** 2, axis=-1, keepdims=True)
    return (v - mu) * jax.lax.rsqrt(var + eps) * w + b


# ----------------------------------------------------------------------------
# Pallas kernel: one grid step == one block of `block_b` batch elements
# ----------------------------------------------------------------------------
def _encoder_kernel(num_heads, block_b, mm_dtype, with_attn,
                    x_ref, g_ref,
                    ln1w_ref, ln1b_ref,
                    wqkv_ref, bqkv_ref,
                    wo_ref, bo_ref,
                    ln2w_ref, ln2b_ref,
                    w1_ref, b1_ref, w2_ref, b2_ref,
                    out_ref, *maybe_attn_ref):
    attn_ref = maybe_attn_ref[0] if with_attn else None

    Bb = block_b
    H = num_heads
    _, N, D = x_ref.shape
    R = Bb * N
    hd = D // H
    threeD = 3 * D
    E = wqkv_ref.shape[1] // threeD

    def mm(a, b):  # f32 accumulation, optionally bf16 operands
        return jnp.dot(a.astype(mm_dtype), b.astype(mm_dtype),
                       preferred_element_type=jnp.float32)

    x = x_ref[...].reshape(R, D)                                  # (R, D) f32

    # ---- norm1 ----
    xn = _layernorm(x, ln1w_ref[...], ln1b_ref[...])

    # ---- all-expert fused QKV projection (one MXU matmul) ----
    qkv_all = mm(xn, wqkv_ref[...]) + bqkv_ref[...]               # (R, E*3D)

    # ---- gating-weighted sum of the E expert slabs (cheap VPU work) ----
    g = g_ref[...]                                                # (R, E)
    qkv = g[:, 0:1] * qkv_all[:, 0:threeD]
    for e in range(1, E):
        qkv = qkv + g[:, e:e + 1] * qkv_all[:, e * threeD:(e + 1) * threeD]
    # qkv: (R, 3D) = gated [Q | K | V]

    scale = 1.0 / math.sqrt(hd)
    q = qkv[:, 0:D] * scale                    # fold 1/sqrt(hd) into q
    k = qkv[:, D:2 * D]
    v = qkv[:, 2 * D:3 * D]

    # ---- (Bb*H, N, hd) head-major layout for ONE batched attention ----
    def split_heads(t):
        parts = [t[bb * N:(bb + 1) * N, h * hd:(h + 1) * hd]
                 for bb in range(Bb) for h in range(H)]
        return jnp.stack(parts, axis=0)        # (Bb*H, N, hd)

    q3, k3, v3 = split_heads(q), split_heads(k), split_heads(v)

    s = jnp.einsum('gnd,gmd->gnm', q3.astype(mm_dtype), k3.astype(mm_dtype),
                   preferred_element_type=jnp.float32)            # (Bb*H, N, N)
    m = jnp.max(s, axis=-1, keepdims=True)
    p = jnp.exp(s - m)
    l = jnp.sum(p, axis=-1, keepdims=True)
    r = pl.reciprocal(l, approx=True)          # EUP slot (otherwise idle)
    r = r * (2.0 - l * r)                      # one Newton step -> f32-accurate
    a = p * r                                  # (Bb*H, N, N)

    ctx3 = jnp.einsum('gnm,gmd->gnd', a.astype(mm_dtype), v3.astype(mm_dtype),
                      preferred_element_type=jnp.float32)         # (Bb*H, N, hd)

    # heads back to lanes -> single (R, D) @ (D, D) output projection
    ctx = jnp.concatenate(
        [jnp.concatenate([ctx3[bb * H + h] for h in range(H)], axis=-1)
         for bb in range(Bb)], axis=0)                            # (R, D)
    attn_out = mm(ctx, wo_ref[...]) + bo_ref[...]

    # ---- residual 1, norm2, FFN, residual 2 ----
    x1 = x + attn_out
    xn2 = _layernorm(x1, ln2w_ref[...], ln2b_ref[...])
    h1 = _gelu_erf(mm(xn2, w1_ref[...]) + b1_ref[...])
    # TODO(synk): Dropout(p=0.1) is identity here (inference mode).
    ffn = mm(h1, w2_ref[...]) + b2_ref[...]

    out_ref[...] = (x1 + ffn).reshape(Bb, N, D)

    if with_attn:
        # single store, directly in the reference (Bb, H, N, N) layout
        attn_ref[...] = a.reshape(Bb, H, N, N)


# ----------------------------------------------------------------------------
# wrapper
# ----------------------------------------------------------------------------
def transformer_encoder_layer(x, gating, params, num_heads, *,
                              block_b=None,
                              matmul_dtype=jnp.float32,
                              return_attn_weights=True):
    """MoE-gated TransformerEncoderLayer forward (inference: dropout = identity).

    matmul_dtype=jnp.bfloat16 runs the matmuls on the native bf16 MXU path
    (f32 accumulation); the default float32 keeps ~1e-6 parity with the
    reference. return_attn_weights=False skips the O(H*N^2) attention-weight
    output entirely.
    """
    B, N, D = x.shape
    E = gating.shape[1]
    H = num_heads
    assert D % H == 0, "embed_dim must be divisible by num_heads"
    Dh = params["w1"].shape[1]
    del Dh  # shapes are taken from the arrays themselves

    if block_b is None:
        # enough rows per step to fill sublanes / MXU, but keep >= 2 grid
        # steps so v7x's two TensorCores both get work.
        target = max(1, min(256 // max(N, 1), max(B // 2, 1)))
        block_b = next(bb for bb in range(min(target, B), 0, -1) if B % bb == 0)
    assert B % block_b == 0, "block_b must divide the batch size"
    Bb = block_b
    grid = (B // Bb,)

    # One (D, E*3D) weight so the expert fold runs on the MXU; slab e holds
    # [Wq_e | Wk_e | Wv_e] (bias handled the same way, summed under gating).
    wqkv_cat = jnp.concatenate(
        [jnp.concatenate([params["wq"][e], params["wk"][e], params["wv"][e]],
                         axis=-1) for e in range(E)], axis=-1)      # (D, E*3D)
    bqkv_cat = jnp.concatenate(
        [jnp.concatenate([params["bq"][e], params["bk"][e], params["bv"][e]],
                         axis=-1) for e in range(E)], axis=-1)      # (1, E*3D)

    # Per-row gating (row = flattened (batch, token)); tiny, lets the kernel
    # use a flat (Bb*N, ...) slab for any block_b.
    g_rows = jnp.repeat(gating, N, axis=0)                          # (B*N, E)

    kernel = partial(_encoder_kernel, H, Bb, matmul_dtype, return_attn_weights)

    # Weights / biases: whole-array, single-buffered VMEM residents (their
    # block never changes across grid steps, so pipelined double-buffering is
    # pure VMEM waste).  TODO(synk): at production D/Dh on v7x (64 MiB VMEM)
    # add a K-tiling grid axis for w1/w2/wqkv_cat instead of full residency.
    vmem = pl.BlockSpec(memory_space=pltpu.MemorySpace.VMEM)

    in_specs = [
        pl.BlockSpec((Bb, N, D), lambda b: (b, 0, 0)),   # x
        pl.BlockSpec((Bb * N, E), lambda b: (b, 0)),     # per-row gating
        vmem, vmem,                                      # ln1 w, b
        vmem, vmem,                                      # wqkv_cat, bqkv_cat
        vmem, vmem,                                      # wo, bo
        vmem, vmem,                                      # ln2 w, b
        vmem, vmem, vmem, vmem,                          # w1, b1, w2, b2
    ]
    out_specs = [pl.BlockSpec((Bb, N, D), lambda b: (b, 0, 0))]
    out_shape = [jax.ShapeDtypeStruct((B, N, D), jnp.float32)]
    if return_attn_weights:
        out_specs.append(pl.BlockSpec((Bb, H, N, N), lambda b: (b, 0, 0, 0)))
        out_shape.append(jax.ShapeDtypeStruct((B, H, N, N), jnp.float32))

    results = pl.pallas_call(
        kernel,
        out_shape=tuple(out_shape),
        grid=grid,
        in_specs=in_specs,
        out_specs=tuple(out_specs),
        compiler_params=pltpu.CompilerParams(
            dimension_semantics=("parallel",)),
    )(x, g_rows,
      params["ln1w"], params["ln1b"],
      wqkv_cat, bqkv_cat,
      params["wo"], params["bo"],
      params["ln2w"], params["ln2b"],
      params["w1"], params["b1"], params["w2"], params["b2"])

    if return_attn_weights:
        out, attn = results
        return out, attn
    return results[0], None


# ----------------------------------------------------------------------------
# pure-JAX reference (mirrors the PyTorch forward)
# ----------------------------------------------------------------------------
def _reference(x, gating, p, H):
    B, N, D = x.shape
    hd = D // H

    xn = _layernorm(x, p["ln1w"][0], p["ln1b"][0])

    def mix(w, b):  # w: (E,D,D)  b: (E,1,D)  gating: (B,E)
        proj = jnp.einsum("bnd,edk->benk", xn, w) + b[None]       # (B,E,N,D)
        return jnp.einsum("be,benk->bnk", gating, proj)

    q = mix(p["wq"], p["bq"])
    k = mix(p["wk"], p["bk"])
    v = mix(p["wv"], p["bv"])

    q = q.reshape(B, N, H, hd).transpose(0, 2, 1, 3)
    k = k.reshape(B, N, H, hd).transpose(0, 2, 1, 3)
    v = v.reshape(B, N, H, hd).transpose(0, 2, 1, 3)

    s = jnp.einsum("bhqd,bhkd->bhqk", q, k) / math.sqrt(hd)
    a = jax.nn.softmax(s, axis=-1)
    ctx = jnp.einsum("bhqk,bhkd->bhqd", a, v).transpose(0, 2, 1, 3).reshape(B, N, D)
    attn_out = ctx @ p["wo"] + p["bo"][0]

    x1 = x + attn_out
    xn2 = _layernorm(x1, p["ln2w"][0], p["ln2b"][0])
    h1 = _gelu_erf(xn2 @ p["w1"] + p["b1"][0])
    ffn = h1 @ p["w2"] + p["b2"][0]
    return x1 + ffn, a


# ----------------------------------------------------------------------------
# main
# ----------------------------------------------------------------------------
if __name__ == "__main__":
    B, N, D = 2, 8, 32          # batch, seq, embed
    H, E = 4, 3                 # num_heads, num_experts
    Dh = int(D * 4.0)           # mlp hidden

    key = jax.random.PRNGKey(0)
    keys = jax.random.split(key, 16)

    def lin(k, fan_in, shape):
        bound = 1.0 / math.sqrt(fan_in)
        return jax.random.uniform(k, shape, jnp.float32, -bound, bound)

    params = dict(
        ln1w=jnp.ones((1, D), jnp.float32), ln1b=jnp.zeros((1, D), jnp.float32),
        ln2w=jnp.ones((1, D), jnp.float32), ln2b=jnp.zeros((1, D), jnp.float32),
        wq=lin(keys[0], D, (E, D, D)), bq=lin(keys[1], D, (E, 1, D)),
        wk=lin(keys[2], D, (E, D, D)), bk=lin(keys[3], D, (E, 1, D)),
        wv=lin(keys[4], D, (E, D, D)), bv=lin(keys[5], D, (E, 1, D)),
        wo=lin(keys[6], D, (D, D)),    bo=lin(keys[7], D, (1, D)),
        w1=lin(keys[8], D, (D, Dh)),   b1=lin(keys[9], D, (1, Dh)),
        w2=lin(keys[10], Dh, (Dh, D)), b2=lin(keys[11], Dh, (1, D)),
    )

    x = jax.random.normal(keys[12], (B, N, D), jnp.float32)
    gating = jax.nn.softmax(jax.random.normal(keys[13], (B, E), jnp.float32), axis=-1)

    out, attn = transformer_encoder_layer(x, gating, params, H)
    jax.block_until_ready((out, attn))

    ref_out, ref_attn = _reference(x, gating, params, H)
    assert jnp.allclose(out, ref_out, rtol=1e-4, atol=1e-4), "output mismatch"
    assert jnp.allclose(attn, ref_attn, rtol=1e-4, atol=1e-4), "attn mismatch"

    print("KERNEL_OK")
</pallas_src>

<mosaic_0001>
module attributes {stable_mosaic.version = 11 : i64} {
  func.func @_encoder_kernel(%arg0: i32, %arg1: memref<1x8x32xf32, #tpu.memory_space<vmem>>, %arg2: memref<8x3xf32, #tpu.memory_space<vmem>>, %arg3: memref<1x32xf32, #tpu.memory_space<vmem>>, %arg4: memref<1x32xf32, #tpu.memory_space<vmem>>, %arg5: memref<32x288xf32, #tpu.memory_space<vmem>>, %arg6: memref<1x288xf32, #tpu.memory_space<vmem>>, %arg7: memref<32x32xf32, #tpu.memory_space<vmem>>, %arg8: memref<1x32xf32, #tpu.memory_space<vmem>>, %arg9: memref<1x32xf32, #tpu.memory_space<vmem>>, %arg10: memref<1x32xf32, #tpu.memory_space<vmem>>, %arg11: memref<32x128xf32, #tpu.memory_space<vmem>>, %arg12: memref<1x128xf32, #tpu.memory_space<vmem>>, %arg13: memref<128x32xf32, #tpu.memory_space<vmem>>, %arg14: memref<1x32xf32, #tpu.memory_space<vmem>>, %arg15: memref<1x8x32xf32, #tpu.memory_space<vmem>>, %arg16: memref<1x4x8x8xf32, #tpu.memory_space<vmem>>) attributes {dimension_semantics = [#tpu.dimension_semantics<parallel>], iteration_bounds = array<i64: 2>, scalar_prefetch = 0 : i64, scratch_operands = 0 : i64, tpu.core_type = #tpu.core_type<tc>, window_params = [{transform_indices = @transform_0, window_bounds = array<i64: 1, 8, 32>}, {transform_indices = @transform_1, window_bounds = array<i64: 8, 3>}, {pipeline_mode = #tpu.pipeline_mode<synchronous>, transform_indices = @transform_2, window_bounds = array<i64: 1, 32>}, {pipeline_mode = #tpu.pipeline_mode<synchronous>, transform_indices = @transform_3, window_bounds = array<i64: 1, 32>}, {pipeline_mode = #tpu.pipeline_mode<synchronous>, transform_indices = @transform_4, window_bounds = array<i64: 32, 288>}, {pipeline_mode = #tpu.pipeline_mode<synchronous>, transform_indices = @transform_5, window_bounds = array<i64: 1, 288>}, {pipeline_mode = #tpu.pipeline_mode<synchronous>, transform_indices = @transform_6, window_bounds = array<i64: 32, 32>}, {pipeline_mode = #tpu.pipeline_mode<synchronous>, transform_indices = @transform_7, window_bounds = array<i64: 1, 32>}, {pipeline_mode = #tpu.pipeline_mode<synchronous>, transform_indices = @transform_8, window_bounds = array<i64: 1, 32>}, {pipeline_mode = #tpu.pipeline_mode<synchronous>, transform_indices = @transform_9, window_bounds = array<i64: 1, 32>}, {pipeline_mode = #tpu.pipeline_mode<synchronous>, transform_indices = @transform_10, window_bounds = array<i64: 32, 128>}, {pipeline_mode = #tpu.pipeline_mode<synchronous>, transform_indices = @transform_11, window_bounds = array<i64: 1, 128>}, {pipeline_mode = #tpu.pipeline_mode<synchronous>, transform_indices = @transform_12, window_bounds = array<i64: 128, 32>}, {pipeline_mode = #tpu.pipeline_mode<synchronous>, transform_indices = @transform_13, window_bounds = array<i64: 1, 32>}, {transform_indices = @transform_14, window_bounds = array<i64: 1, 8, 32>}, {transform_indices = @transform_15, window_bounds = array<i64: 1, 4, 8, 8>}]} {
    %c0 = arith.constant 0 : index
    %c0_0 = arith.constant 0 : index
    %c0_1 = arith.constant 0 : index
    %0 = vector.load %arg1[%c0, %c0_0, %c0_1] : memref<1x8x32xf32, #tpu.memory_space<vmem>>, vector<1x8x32xf32>
    %1 = vector.shape_cast %0 : vector<1x8x32xf32> to vector<8x32xf32>
    %c0_2 = arith.constant 0 : index
    %c0_3 = arith.constant 0 : index
    %2 = vector.load %arg3[%c0_2, %c0_3] : memref<1x32xf32, #tpu.memory_space<vmem>>, vector<1x32xf32>
    %c0_4 = arith.constant 0 : index
    %c0_5 = arith.constant 0 : index
    %3 = vector.load %arg4[%c0_4, %c0_5] : memref<1x32xf32, #tpu.memory_space<vmem>>, vector<1x32xf32>
    %cst = arith.constant dense<0.000000e+00> : vector<8xf32>
    %4 = vector.multi_reduction <add>, %1, %cst [1] : vector<8x32xf32> to vector<8xf32>
    %5 = vector.shape_cast %4 : vector<8xf32> to vector<8x1xf32>
    %cst_6 = arith.constant 3.200000e+01 : f32
    %6 = vector.broadcast %cst_6 : f32 to vector<8x1xf32>
    %7 = arith.divf %5, %6 : vector<8x1xf32>
    %8 = vector.broadcast %7 : vector<8x1xf32> to vector<8x32xf32>
    %9 = arith.subf %1, %8 : vector<8x32xf32>
    %10 = arith.mulf %9, %9 : vector<8x32xf32>
    %cst_7 = arith.constant dense<0.000000e+00> : vector<8xf32>
    %11 = vector.multi_reduction <add>, %10, %cst_7 [1] : vector<8x32xf32> to vector<8xf32>
    %12 = vector.shape_cast %11 : vector<8xf32> to vector<8x1xf32>
    %cst_8 = arith.constant 3.200000e+01 : f32
    %13 = vector.broadcast %cst_8 : f32 to vector<8x1xf32>
    %14 = arith.divf %12, %13 : vector<8x1xf32>
    %15 = vector.broadcast %7 : vector<8x1xf32> to vector<8x32xf32>
    %16 = arith.subf %1, %15 : vector<8x32xf32>
    %cst_9 = arith.constant 9.99999974E-6 : f32
    %17 = vector.broadcast %cst_9 : f32 to vector<8x1xf32>
    %18 = arith.addf %14, %17 : vector<8x1xf32>
    %19 = math.rsqrt %18 : vector<8x1xf32>
    %20 = vector.broadcast %19 : vector<8x1xf32> to vector<8x32xf32>
    %21 = arith.mulf %16, %20 : vector<8x32xf32>
    %22 = vector.broadcast %2 : vector<1x32xf32> to vector<8x32xf32>
    %23 = arith.mulf %21, %22 : vector<8x32xf32>
    %24 = vector.broadcast %3 : vector<1x32xf32> to vector<8x32xf32>
    %25 = arith.addf %23, %24 : vector<8x32xf32>
    %c0_10 = arith.constant 0 : index
    %c0_11 = arith.constant 0 : index
    %26 = vector.load %arg5[%c0_10, %c0_11] : memref<32x288xf32, #tpu.memory_space<vmem>>, vector<32x288xf32>
    %cst_12 = arith.constant dense<0.000000e+00> : vector<8x288xf32>
    %27 = tpu.matmul %25, %26, %cst_12 {dimension_numbers = #tpu.dot_dimension_numbers<[1], [0], [0], [1], [0, 0, 1, 1], [], []>} : vector<8x32xf32>, vector<32x288xf32>, vector<8x288xf32> -> vector<8x288xf32>
    %c0_13 = arith.constant 0 : index
    %c0_14 = arith.constant 0 : index
    %28 = vector.load %arg6[%c0_13, %c0_14] : memref<1x288xf32, #tpu.memory_space<vmem>>, vector<1x288xf32>
    %29 = vector.broadcast %28 : vector<1x288xf32> to vector<8x288xf32>
    %30 = arith.addf %27, %29 : vector<8x288xf32>
    %c0_15 = arith.constant 0 : index
    %c0_16 = arith.constant 0 : index
    %31 = vector.load %arg2[%c0_15, %c0_16] : memref<8x3xf32, #tpu.memory_space<vmem>>, vector<8x3xf32>
    %32 = vector.extract_strided_slice %31 {offsets = [0, 0], sizes = [8, 1], strides = [1, 1]} : vector<8x3xf32> to vector<8x1xf32>
    %33 = vector.extract_strided_slice %30 {offsets = [0, 0], sizes = [8, 96], strides = [1, 1]} : vector<8x288xf32> to vector<8x96xf32>
    %34 = vector.broadcast %32 : vector<8x1xf32> to vector<8x96xf32>
    %35 = arith.mulf %34, %33 : vector<8x96xf32>
    %36 = vector.extract_strided_slice %31 {offsets = [0, 1], sizes = [8, 1], strides = [1, 1]} : vector<8x3xf32> to vector<8x1xf32>
    %37 = vector.extract_strided_slice %30 {offsets = [0, 96], sizes = [8, 96], strides = [1, 1]} : vector<8x288xf32> to vector<8x96xf32>
    %38 = vector.broadcast %36 : vector<8x1xf32> to vector<8x96xf32>
    %39 = arith.mulf %38, %37 : vector<8x96xf32>
    %40 = arith.addf %35, %39 : vector<8x96xf32>
    %41 = vector.extract_strided_slice %31 {offsets = [0, 2], sizes = [8, 1], strides = [1, 1]} : vector<8x3xf32> to vector<8x1xf32>
    %42 = vector.extract_strided_slice %30 {offsets = [0, 192], sizes = [8, 96], strides = [1, 1]} : vector<8x288xf32> to vector<8x96xf32>
    %43 = vector.broadcast %41 : vector<8x1xf32> to vector<8x96xf32>
    %44 = arith.mulf %43, %42 : vector<8x96xf32>
    %45 = arith.addf %40, %44 : vector<8x96xf32>
    %46 = vector.extract_strided_slice %45 {offsets = [0, 0], sizes = [8, 32], strides = [1, 1]} : vector<8x96xf32> to vector<8x32xf32>
    %cst_17 = arith.constant 0.353553385 : f32
    %47 = vector.broadcast %cst_17 : f32 to vector<8x32xf32>
    %48 = arith.mulf %46, %47 : vector<8x32xf32>
    %49 = vector.extract_strided_slice %45 {offsets = [0, 32], sizes = [8, 32], strides = [1, 1]} : vector<8x96xf32> to vector<8x32xf32>
    %50 = vector.extract_strided_slice %45 {offsets = [0, 64], sizes = [8, 32], strides = [1, 1]} : vector<8x96xf32> to vector<8x32xf32>
    %51 = vector.extract_strided_slice %48 {offsets = [0, 0], sizes = [8, 8], strides = [1, 1]} : vector<8x32xf32> to vector<8x8xf32>
    %52 = vector.extract_strided_slice %48 {offsets = [0, 8], sizes = [8, 8], strides = [1, 1]} : vector<8x32xf32> to vector<8x8xf32>
    %53 = vector.extract_strided_slice %48 {offsets = [0, 16], sizes = [8, 8], strides = [1, 1]} : vector<8x32xf32> to vector<8x8xf32>
    %54 = vector.extract_strided_slice %48 {offsets = [0, 24], sizes = [8, 8], strides = [1, 1]} : vector<8x32xf32> to vector<8x8xf32>
    %55 = vector.shape_cast %51 : vector<8x8xf32> to vector<1x8x8xf32>
    %56 = vector.shape_cast %52 : vector<8x8xf32> to vector<1x8x8xf32>
    %57 = vector.shape_cast %53 : vector<8x8xf32> to vector<1x8x8xf32>
    %58 = vector.shape_cast %54 : vector<8x8xf32> to vector<1x8x8xf32>
    %59 = tpu.concatenate %55, %56, %57, %58 in 0 : vector<1x8x8xf32>, vector<1x8x8xf32>, vector<1x8x8xf32>, vector<1x8x8xf32> -> vector<4x8x8xf32>
    %60 = vector.extract_strided_slice %49 {offsets = [0, 0], sizes = [8, 8], strides = [1, 1]} : vector<8x32xf32> to vector<8x8xf32>
    %61 = vector.extract_strided_slice %49 {offsets = [0, 8], sizes = [8, 8], strides = [1, 1]} : vector<8x32xf32> to vector<8x8xf32>
    %62 = vector.extract_strided_slice %49 {offsets = [0, 16], sizes = [8, 8], strides = [1, 1]} : vector<8x32xf32> to vector<8x8xf32>
    %63 = vector.extract_strided_slice %49 {offsets = [0, 24], sizes = [8, 8], strides = [1, 1]} : vector<8x32xf32> to vector<8x8xf32>
    %64 = vector.shape_cast %60 : vector<8x8xf32> to vector<1x8x8xf32>
    %65 = vector.shape_cast %61 : vector<8x8xf32> to vector<1x8x8xf32>
    %66 = vector.shape_cast %62 : vector<8x8xf32> to vector<1x8x8xf32>
    %67 = vector.shape_cast %63 : vector<8x8xf32> to vector<1x8x8xf32>
    %68 = tpu.concatenate %64, %65, %66, %67 in 0 : vector<1x8x8xf32>, vector<1x8x8xf32>, vector<1x8x8xf32>, vector<1x8x8xf32> -> vector<4x8x8xf32>
    %69 = vector.extract_strided_slice %50 {offsets = [0, 0], sizes = [8, 8], strides = [1, 1]} : vector<8x32xf32> to vector<8x8xf32>
    %70 = vector.extract_strided_slice %50 {offsets = [0, 8], sizes = [8, 8], strides = [1, 1]} : vector<8x32xf32> to vector<8x8xf32>
    %71 = vector.extract_strided_slice %50 {offsets = [0, 16], sizes = [8, 8], strides = [1, 1]} : vector<8x32xf32> to vector<8x8xf32>
    %72 = vector.extract_strided_slice %50 {offsets = [0, 24], sizes = [8, 8], strides = [1, 1]} : vector<8x32xf32> to vector<8x8xf32>
    %73 = vector.shape_cast %69 : vector<8x8xf32> to vector<1x8x8xf32>
    %74 = vector.shape_cast %70 : vector<8x8xf32> to vector<1x8x8xf32>
    %75 = vector.shape_cast %71 : vector<8x8xf32> to vector<1x8x8xf32>
    %76 = vector.shape_cast %72 : vector<8x8xf32> to vector<1x8x8xf32>
    %77 = tpu.concatenate %73, %74, %75, %76 in 0 : vector<1x8x8xf32>, vector<1x8x8xf32>, vector<1x8x8xf32>, vector<1x8x8xf32> -> vector<4x8x8xf32>
    "tpu.trace_start"() <{level = 10 : i32, message = "gnd,gmd->gnm"}> : () -> ()
    %cst_18 = arith.constant dense<0.000000e+00> : vector<4x8x8xf32>
    %78 = tpu.matmul %59, %68, %cst_18 {dimension_numbers = #tpu.dot_dimension_numbers<[2], [2], [1], [1], [0, 0, 0, 1, 1, 1], [0], [0]>} : vector<4x8x8xf32>, vector<4x8x8xf32>, vector<4x8x8xf32> -> vector<4x8x8xf32>
    "tpu.trace_stop"() : () -> ()
    %cst_19 = arith.constant dense<0xFF800000> : vector<4x8xf32>
    %79 = vector.multi_reduction <maximumf>, %78, %cst_19 [2] : vector<4x8x8xf32> to vector<4x8xf32>
    %80 = vector.shape_cast %79 : vector<4x8xf32> to vector<4x8x1xf32>
    %81 = vector.broadcast %80 : vector<4x8x1xf32> to vector<4x8x8xf32>
    %82 = arith.subf %78, %81 : vector<4x8x8xf32>
    %83 = math.exp %82 : vector<4x8x8xf32>
    %cst_20 = arith.constant dense<0.000000e+00> : vector<4x8xf32>
    %84 = vector.multi_reduction <add>, %83, %cst_20 [2] : vector<4x8x8xf32> to vector<4x8xf32>
    %85 = vector.shape_cast %84 : vector<4x8xf32> to vector<4x8x1xf32>
    %86 = tpu.reciprocal %85 {approx = true} : vector<4x8x1xf32> -> vector<4x8x1xf32>
    %87 = arith.mulf %85, %86 : vector<4x8x1xf32>
    %cst_21 = arith.constant 2.000000e+00 : f32
    %88 = vector.broadcast %cst_21 : f32 to vector<4x8x1xf32>
    %89 = arith.subf %88, %87 : vector<4x8x1xf32>
    %90 = arith.mulf %86, %89 : vector<4x8x1xf32>
    %91 = vector.broadcast %90 : vector<4x8x1xf32> to vector<4x8x8xf32>
    %92 = arith.mulf %83, %91 : vector<4x8x8xf32>
    "tpu.trace_start"() <{level = 10 : i32, message = "gnm,gmd->gnd"}> : () -> ()
    %cst_22 = arith.constant dense<0.000000e+00> : vector<4x8x8xf32>
    %93 = tpu.matmul %92, %77, %cst_22 {dimension_numbers = #tpu.dot_dimension_numbers<[2], [1], [1], [2], [0, 0, 0, 1, 1, 2], [0], [0]>} : vector<4x8x8xf32>, vector<4x8x8xf32>, vector<4x8x8xf32> -> vector<4x8x8xf32>
    "tpu.trace_stop"() : () -> ()
    %94 = vector.extract_strided_slice %93 {offsets = [0, 0, 0], sizes = [1, 8, 8], strides = [1, 1, 1]} : vector<4x8x8xf32> to vector<1x8x8xf32>
    %95 = vector.shape_cast %94 : vector<1x8x8xf32> to vector<8x8xf32>
    %96 = vector.extract_strided_slice %93 {offsets = [1, 0, 0], sizes = [1, 8, 8], strides = [1, 1, 1]} : vector<4x8x8xf32> to vector<1x8x8xf32>
    %97 = vector.shape_cast %96 : vector<1x8x8xf32> to vector<8x8xf32>
    %98 = vector.extract_strided_slice %93 {offsets = [2, 0, 0], sizes = [1, 8, 8], strides = [1, 1, 1]} : vector<4x8x8xf32> to vector<1x8x8xf32>
    %99 = vector.shape_cast %98 : vector<1x8x8xf32> to vector<8x8xf32>
    %100 = vector.extract_strided_slice %93 {offsets = [3, 0, 0], sizes = [1, 8, 8], strides = [1, 1, 1]} : vector<4x8x8xf32> to vector<1x8x8xf32>
    %101 = vector.shape_cast %100 : vector<1x8x8xf32> to vector<8x8xf32>
    %102 = tpu.concatenate %95, %97, %99, %101 in 1 : vector<8x8xf32>, vector<8x8xf32>, vector<8x8xf32>, vector<8x8xf32> -> vector<8x32xf32>
    %c0_23 = arith.constant 0 : index
    %c0_24 = arith.constant 0 : index
    %103 = vector.load %arg7[%c0_23, %c0_24] : memref<32x32xf32, #tpu.memory_space<vmem>>, vector<32x32xf32>
    %cst_25 = arith.constant dense<0.000000e+00> : vector<8x32xf32>
    %104 = tpu.matmul %102, %103, %cst_25 {dimension_numbers = #tpu.dot_dimension_numbers<[1], [0], [0], [1], [0, 0, 1, 1], [], []>} : vector<8x32xf32>, vector<32x32xf32>, vector<8x32xf32> -> vector<8x32xf32>
    %c0_26 = arith.constant 0 : index
    %c0_27 = arith.constant 0 : index
    %105 = vector.load %arg8[%c0_26, %c0_27] : memref<1x32xf32, #tpu.memory_space<vmem>>, vector<1x32xf32>
    %106 = vector.broadcast %105 : vector<1x32xf32> to vector<8x32xf32>
    %107 = arith.addf %104, %106 : vector<8x32xf32>
    %108 = arith.addf %1, %107 : vector<8x32xf32>
    %c0_28 = arith.constant 0 : index
    %c0_29 = arith.constant 0 : index
    %109 = vector.load %arg9[%c0_28, %c0_29] : memref<1x32xf32, #tpu.memory_space<vmem>>, vector<1x32xf32>
    %c0_30 = arith.constant 0 : index
    %c0_31 = arith.constant 0 : index
    %110 = vector.load %arg10[%c0_30, %c0_31] : memref<1x32xf32, #tpu.memory_space<vmem>>, vector<1x32xf32>
    %cst_32 = arith.constant dense<0.000000e+00> : vector<8xf32>
    %111 = vector.multi_reduction <add>, %108, %cst_32 [1] : vector<8x32xf32> to vector<8xf32>
    %112 = vector.shape_cast %111 : vector<8xf32> to vector<8x1xf32>
    %cst_33 = arith.constant 3.200000e+01 : f32
    %113 = vector.broadcast %cst_33 : f32 to vector<8x1xf32>
    %114 = arith.divf %112, %113 : vector<8x1xf32>
    %115 = vector.broadcast %114 : vector<8x1xf32> to vector<8x32xf32>
    %116 = arith.subf %108, %115 : vector<8x32xf32>
    %117 = arith.mulf %116, %116 : vector<8x32xf32>
    %cst_34 = arith.constant dense<0.000000e+00> : vector<8xf32>
    %118 = vector.multi_reduction <add>, %117, %cst_34 [1] : vector<8x32xf32> to vector<8xf32>
    %119 = vector.shape_cast %118 : vector<8xf32> to vector<8x1xf32>
    %cst_35 = arith.constant 3.200000e+01 : f32
    %120 = vector.broadcast %cst_35 : f32 to vector<8x1xf32>
    %121 = arith.divf %119, %120 : vector<8x1xf32>
    %122 = vector.broadcast %114 : vector<8x1xf32> to vector<8x32xf32>
    %123 = arith.subf %108, %122 : vector<8x32xf32>
    %cst_36 = arith.constant 9.99999974E-6 : f32
    %124 = vector.broadcast %cst_36 : f32 to vector<8x1xf32>
    %125 = arith.addf %121, %124 : vector<8x1xf32>
    %126 = math.rsqrt %125 : vector<8x1xf32>
    %127 = vector.broadcast %126 : vector<8x1xf32> to vector<8x32xf32>
    %128 = arith.mulf %123, %127 : vector<8x32xf32>
    %129 = vector.broadcast %109 : vector<1x32xf32> to vector<8x32xf32>
    %130 = arith.mulf %128, %129 : vector<8x32xf32>
    %131 = vector.broadcast %110 : vector<1x32xf32> to vector<8x32xf32>
    %132 = arith.addf %130, %131 : vector<8x32xf32>
    %c0_37 = arith.constant 0 : index
    %c0_38 = arith.constant 0 : index
    %133 = vector.load %arg11[%c0_37, %c0_38] : memref<32x128xf32, #tpu.memory_space<vmem>>, vector<32x128xf32>
    %cst_39 = arith.constant dense<0.000000e+00> : vector<8x128xf32>
    %134 = tpu.matmul %132, %133, %cst_39 {dimension_numbers = #tpu.dot_dimension_numbers<[1], [0], [0], [1], [0, 0, 1, 1], [], []>} : vector<8x32xf32>, vector<32x128xf32>, vector<8x128xf32> -> vector<8x128xf32>
    %c0_40 = arith.constant 0 : index
    %c0_41 = arith.constant 0 : index
    %135 = vector.load %arg12[%c0_40, %c0_41] : memref<1x128xf32, #tpu.memory_space<vmem>>, vector<1x128xf32>
    %136 = vector.broadcast %135 : vector<1x128xf32> to vector<8x128xf32>
    %137 = arith.addf %134, %136 : vector<8x128xf32>
    %cst_42 = arith.constant 0.707106769 : f32
    %138 = vector.broadcast %cst_42 : f32 to vector<8x128xf32>
    %139 = arith.mulf %137, %138 : vector<8x128xf32>
    %cst_43 = arith.constant 0.000000e+00 : f32
    %140 = vector.broadcast %cst_43 : f32 to vector<8x128xf32>
    %141 = arith.cmpf oge, %139, %140 : vector<8x128xf32>
    %cst_44 = arith.constant 1.000000e+00 : f32
    %cst_45 = arith.constant -1.000000e+00 : f32
    %142 = vector.broadcast %cst_44 : f32 to vector<8x128xf32>
    %143 = vector.broadcast %cst_45 : f32 to vector<8x128xf32>
    %144 = arith.select %141, %142, %143 : vector<8x128xi1>, vector<8x128xf32>
    %145 = math.absf %139 : vector<8x128xf32>
    %cst_46 = arith.constant 0.327591091 : f32
    %146 = vector.broadcast %cst_46 : f32 to vector<8x128xf32>
    %147 = arith.mulf %146, %145 : vector<8x128xf32>
    %cst_47 = arith.constant 1.000000e+00 : f32
    %148 = vector.broadcast %cst_47 : f32 to vector<8x128xf32>
    %149 = arith.addf %148, %147 : vector<8x128xf32>
    %cst_48 = arith.constant 1.000000e+00 : f32
    %150 = vector.broadcast %cst_48 : f32 to vector<8x128xf32>
    %151 = arith.divf %150, %149 : vector<8x128xf32>
    %cst_49 = arith.constant 1.06140542 : f32
    %152 = vector.broadcast %cst_49 : f32 to vector<8x128xf32>
    %153 = arith.mulf %151, %152 : vector<8x128xf32>
    %cst_50 = arith.constant -1.45315206 : f32
    %154 = vector.broadcast %cst_50 : f32 to vector<8x128xf32>
    %155 = arith.addf %154, %153 : vector<8x128xf32>
    %156 = arith.mulf %151, %155 : vector<8x128xf32>
    %cst_51 = arith.constant 1.42141378 : f32
    %157 = vector.broadcast %cst_51 : f32 to vector<8x128xf32>
    %158 = arith.addf %157, %156 : vector<8x128xf32>
    %159 = arith.mulf %151, %158 : vector<8x128xf32>
    %cst_52 = arith.constant -0.284496725 : f32
    %160 = vector.broadcast %cst_52 : f32 to vector<8x128xf32>
    %161 = arith.addf %160, %159 : vector<8x128xf32>
    %162 = arith.mulf %151, %161 : vector<8x128xf32>
    %cst_53 = arith.constant 0.254829586 : f32
    %163 = vector.broadcast %cst_53 : f32 to vector<8x128xf32>
    %164 = arith.addf %163, %162 : vector<8x128xf32>
    %165 = arith.mulf %151, %164 : vector<8x128xf32>
    %cst_54 = arith.constant 0.000000e+00 : f32
    %166 = vector.broadcast %cst_54 : f32 to vector<8x128xf32>
    %167 = arith.subf %166, %145 : vector<8x128xf32>
    %168 = arith.mulf %167, %145 : vector<8x128xf32>
    %169 = math.exp %168 : vector<8x128xf32>
    %170 = arith.mulf %165, %169 : vector<8x128xf32>
    %cst_55 = arith.constant 1.000000e+00 : f32
    %171 = vector.broadcast %cst_55 : f32 to vector<8x128xf32>
    %172 = arith.subf %171, %170 : vector<8x128xf32>
    %173 = arith.mulf %144, %172 : vector<8x128xf32>
    %cst_56 = arith.constant 5.000000e-01 : f32
    %174 = vector.broadcast %cst_56 : f32 to vector<8x128xf32>
    %175 = arith.mulf %174, %137 : vector<8x128xf32>
    %cst_57 = arith.constant 1.000000e+00 : f32
    %176 = vector.broadcast %cst_57 : f32 to vector<8x128xf32>
    %177 = arith.addf %176, %173 : vector<8x128xf32>
    %178 = arith.mulf %175, %177 : vector<8x128xf32>
    %c0_58 = arith.constant 0 : index
    %c0_59 = arith.constant 0 : index
    %179 = vector.load %arg13[%c0_58, %c0_59] : memref<128x32xf32, #tpu.memory_space<vmem>>, vector<128x32xf32>
    %cst_60 = arith.constant dense<0.000000e+00> : vector<8x32xf32>
    %180 = tpu.matmul %178, %179, %cst_60 {dimension_numbers = #tpu.dot_dimension_numbers<[1], [0], [0], [1], [0, 0, 1, 1], [], []>} : vector<8x128xf32>, vector<128x32xf32>, vector<8x32xf32> -> vector<8x32xf32>
    %c0_61 = arith.constant 0 : index
    %c0_62 = arith.constant 0 : index
    %181 = vector.load %arg14[%c0_61, %c0_62] : memref<1x32xf32, #tpu.memory_space<vmem>>, vector<1x32xf32>
    %182 = vector.broadcast %181 : vector<1x32xf32> to vector<8x32xf32>
    %183 = arith.addf %180, %182 : vector<8x32xf32>
    %184 = arith.addf %108, %183 : vector<8x32xf32>
    %185 = vector.shape_cast %184 : vector<8x32xf32> to vector<1x8x32xf32>
    %c0_63 = arith.constant 0 : index
    %c0_64 = arith.constant 0 : index
    %c0_65 = arith.constant 0 : index
    %186 = vector.load %arg15[%c0_63, %c0_64, %c0_65] : memref<1x8x32xf32, #tpu.memory_space<vmem>>, vector<1x8x32xf32>
    tpu.vector_store %arg15[%c0_63, %c0_64, %c0_65], %185 {strides = array<i32>} : memref<1x8x32xf32, #tpu.memory_space<vmem>>, vector<1x8x32xf32>,
    %187 = vector.shape_cast %92 : vector<4x8x8xf32> to vector<1x4x8x8xf32>
    %c0_66 = arith.constant 0 : index
    %c0_67 = arith.constant 0 : index
    %c0_68 = arith.constant 0 : index
    %c0_69 = arith.constant 0 : index
    %188 = vector.load %arg16[%c0_66, %c0_67, %c0_68, %c0_69] : memref<1x4x8x8xf32, #tpu.memory_space<vmem>>, vector<1x4x8x8xf32>
    tpu.vector_store %arg16[%c0_66, %c0_67, %c0_68, %c0_69], %187 {strides = array<i32>} : memref<1x4x8x8xf32, #tpu.memory_space<vmem>>, vector<1x4x8x8xf32>,
    return
  }
  func.func @transform_0(%arg0: i32) -> (i32, i32, i32) {
    %c0_i32 = arith.constant 0 : i32
    %c0_i32_0 = arith.constant 0 : i32
    %c0_i32_1 = arith.constant 0 : i32
    return %arg0, %c0_i32, %c0_i32_0 : i32, i32, i32
  }
  func.func @transform_1(%arg0: i32) -> (i32, i32) {
    %c0_i32 = arith.constant 0 : i32
    %c0_i32_0 = arith.constant 0 : i32
    return %arg0, %c0_i32 : i32, i32
  }
  func.func @transform_2(%arg0: i32) -> (i32, i32) {
    %c0_i32 = arith.constant 0 : i32
    %c0_i32_0 = arith.constant 0 : i32
    %c0_i32_1 = arith.constant 0 : i32
    return %c0_i32, %c0_i32_0 : i32, i32
  }
  func.func @transform_3(%arg0: i32) -> (i32, i32) {
    %c0_i32 = arith.constant 0 : i32
    %c0_i32_0 = arith.constant 0 : i32
    %c0_i32_1 = arith.constant 0 : i32
    return %c0_i32, %c0_i32_0 : i32, i32
  }
  func.func @transform_4(%arg0: i32) -> (i32, i32) {
    %c0_i32 = arith.constant 0 : i32
    %c0_i32_0 = arith.constant 0 : i32
    %c0_i32_1 = arith.constant 0 : i32
    return %c0_i32, %c0_i32_0 : i32, i32
  }
  func.func @transform_5(%arg0: i32) -> (i32, i32) {
    %c0_i32 = arith.constant 0 : i32
    %c0_i32_0 = arith.constant 0 : i32
    %c0_i32_1 = arith.constant 0 : i32
    return %c0_i32, %c0_i32_0 : i32, i32
  }
  func.func @transform_6(%arg0: i32) -> (i32, i32) {
    %c0_i32 = arith.constant 0 : i32
    %c0_i32_0 = arith.constant 0 : i32
    %c0_i32_1 = arith.constant 0 : i32
    return %c0_i32, %c0_i32_0 : i32, i32
  }
  func.func @transform_7(%arg0: i32) -> (i32, i32) {
    %c0_i32 = arith.constant 0 : i32
    %c0_i32_0 = arith.constant 0 : i32
    %c0_i32_1 = arith.constant 0 : i32
    return %c0_i32, %c0_i32_0 : i32, i32
  }
  func.func @transform_8(%arg0: i32) -> (i32, i32) {
    %c0_i32 = arith.constant 0 : i32
    %c0_i32_0 = arith.constant 0 : i32
    %c0_i32_1 = arith.constant 0 : i32
    return %c0_i32, %c0_i32_0 : i32, i32
  }
  func.func @transform_9(%arg0: i32) -> (i32, i32) {
    %c0_i32 = arith.constant 0 : i32
    %c0_i32_0 = arith.constant 0 : i32
    %c0_i32_1 = arith.constant 0 : i32
    return %c0_i32, %c0_i32_0 : i32, i32
  }
  func.func @transform_10(%arg0: i32) -> (i32, i32) {
    %c0_i32 = arith.constant 0 : i32
    %c0_i32_0 = arith.constant 0 : i32
    %c0_i32_1 = arith.constant 0 : i32
    return %c0_i32, %c0_i32_0 : i32, i32
  }
  func.func @transform_11(%arg0: i32) -> (i32, i32) {
    %c0_i32 = arith.constant 0 : i32
    %c0_i32_0 = arith.constant 0 : i32
    %c0_i32_1 = arith.constant 0 : i32
    return %c0_i32, %c0_i32_0 : i32, i32
  }
  func.func @transform_12(%arg0: i32) -> (i32, i32) {
    %c0_i32 = arith.constant 0 : i32
    %c0_i32_0 = arith.constant 0 : i32
    %c0_i32_1 = arith.constant 0 : i32
    return %c0_i32, %c0_i32_0 : i32, i32
  }
  func.func @transform_13(%arg0: i32) -> (i32, i32) {
    %c0_i32 = arith.constant 0 : i32
    %c0_i32_0 = arith.constant 0 : i32
    %c0_i32_1 = arith.constant 0 : i32
    return %c0_i32, %c0_i32_0 : i32, i32
  }
  func.func @transform_14(%arg0: i32) -> (i32, i32, i32) {
    %c0_i32 = arith.constant 0 : i32
    %c0_i32_0 = arith.constant 0 : i32
    %c0_i32_1 = arith.constant 0 : i32
    return %arg0, %c0_i32, %c0_i32_0 : i32, i32, i32
  }
  func.func @transform_15(%arg0: i32) -> (i32, i32, i32, i32) {
    %c0_i32 = arith.constant 0 : i32
    %c0_i32_0 = arith.constant 0 : i32
    %c0_i32_1 = arith.constant 0 : i32
    %c0_i32_2 = arith.constant 0 : i32
    return %arg0, %c0_i32, %c0_i32_0, %c0_i32_1 : i32, i32, i32, i32
  }
}

</mosaic_0001>

<llo_original>
// kernel: tpu_custom_call.1
$region0: #{tpu_custom_call.1}
  #allocation0 [shape = 'u32[]', space=smem, size = 0x4, offset = 0x4, fixed_abs, tag = 'smem constant byte address 0x4 - core index']
  #allocation1 [shape = 'u32[144,128]{1,0:T(1,128)}', space=vmem, size = 0x12000, scoped, tag = 'internal scratch']
  %s0 = inlined_call_operand.hbm [shape: f32[2,8,32], index: 0, kind: input, shape index: {}]
  %s1 = inlined_call_operand.vmem [shape: f32[16,3], index: 1, kind: input, shape index: {}]
  %s2 = inlined_call_operand.vmem [shape: f32[1,32], index: 2, kind: input, shape index: {}]
  %s3 = inlined_call_operand.vmem [shape: f32[1,32], index: 3, kind: input, shape index: {}]
  %s4 = inlined_call_operand.vmem [shape: f32[32,288], index: 4, kind: input, shape index: {}]
  %s5 = inlined_call_operand.vmem [shape: f32[1,288], index: 5, kind: input, shape index: {}]
  %s6 = inlined_call_operand.vmem [shape: f32[32,32], index: 6, kind: input, shape index: {}]
  %s7 = inlined_call_operand.vmem [shape: f32[1,32], index: 7, kind: input, shape index: {}]
  %s8 = inlined_call_operand.vmem [shape: f32[1,32], index: 8, kind: input, shape index: {}]
  %s9 = inlined_call_operand.vmem [shape: f32[1,32], index: 9, kind: input, shape index: {}]
  %s10 = inlined_call_operand.vmem [shape: f32[32,128], index: 10, kind: input, shape index: {}]
  %s11 = inlined_call_operand.vmem [shape: f32[1,128], index: 11, kind: input, shape index: {}]
  %s12 = inlined_call_operand.vmem [shape: f32[128,32], index: 12, kind: input, shape index: {}]
  %s13 = inlined_call_operand.hbm [shape: f32[1,32], index: 13, kind: input, shape index: {}]
  %s14 = inlined_call_operand.hbm [shape: f32[2,8,32], index: 14, kind: output, shape index: {0}]
  %s15 = inlined_call_operand.hbm [shape: f32[2,4,8,8], index: 15, kind: output, shape index: {1}]
  %16 = xla_tuple %s14, %s15
  %s17 = sld [smem:[#allocation0]]
  $region105: #{tpu_custom_call.1} parent=0
    _
  %s19 = ssub.s32 1, %s17
  %s20 = scalar_select 0, %s19, %s17
  $region1: #{tpu_custom_call.1} parent=0
    #allocation2 [shape = 'u8[8192]{0}', space=vmem, size = 0x2000, scoped, tag = 'input window, operand 0']
    #allocation3 [shape = 's32[2]{0}', space=sflag, size = 0x8, scoped, tag = 'scoped memory for tpu_custom_call.1']
    #allocation4 [shape = 's32[2]{0}', space=sflag, size = 0x8, scoped, tag = 'scoped memory for tpu_custom_call.1']
    #allocation5 [shape = 'u8[512]{0}', space=vmem, size = 0x400, scoped, tag = 'input window, operand 13, single buffered']
    #allocation6 [shape = 's32[1]{0}', space=sflag, size = 0x4, scoped, tag = 'scoped memory for tpu_custom_call.1']
    #allocation7 [shape = 'u8[8192]{0}', space=vmem, size = 0x2000, scoped, tag = 'output window, operand 0']
    #allocation8 [shape = 'u8[32768]{0}', space=vmem, size = 0x8000, scoped, tag = 'output window, operand 1']
    #allocation9 [shape = 's32[2]{0}', space=sflag, size = 0x8, scoped, tag = 'scoped memory for tpu_custom_call.1']
    %21 = vsyncpa [#allocation3], 0
    %s22 = scalar_lea.sflag [#allocation3], 1
    %23 = vsyncpa %s22, 0
    %24 = vsyncpa [#allocation6], 0
    %25 = vsyncpa [#allocation4], 0
    %s26 = scalar_lea.sflag [#allocation4], 1
    %27 = vsyncpa %s26, 0
    %28 = vsyncpa [#allocation9], 0
    %s29 = scalar_lea.sflag [#allocation9], 1
    %30 = vsyncpa %s29, 0
    loop: start=0, step=1, limit=4
    $region2: #{tpu_custom_call.1} parent=1 // loop_pre_header
      _
    $region3: #{tpu_custom_call.1} parent=1 // loop_header
      %s32 = sphi 0, %s36
      %p33 = scmp.ge.s32.totalorder %s32, 4
      %s42 = sphi 0, %s44
      %s45 = sphi 0, %s42
      %s46 = sphi 0, %s45
      %s62 = sphi 0, %s46
      %s68 = sphi 0, %s70
      %s71 = sphi 0, %s68
      %s72 = sphi 0, %s71
      %s88 = sphi 0, %s72
      %s92 = sphi 0, %s92
      %s94 = sphi 0, %s92
      %s95 = sphi 0, %s94
      %s109 = sphi 0, %s95
      %s113 = sphi 0, %s113
      %s115 = sphi 0, %s113
      %s116 = sphi 0, %s115
      %s130 = sphi 0, %s116
      %s134 = sphi 0, %s134
      %s136 = sphi 0, %s134
      %s137 = sphi 0, %s136
      %s151 = sphi 0, %s137
      %s155 = sphi 0, %s155
      %s157 = sphi 0, %s155
      %s158 = sphi 0, %s157
      %s172 = sphi 0, %s158
      %s176 = sphi 0, %s176
      %s178 = sphi 0, %s176
      %s179 = sphi 0, %s178
      %s193 = sphi 0, %s179
      %s197 = sphi 0, %s197
      %s199 = sphi 0, %s197
      %s200 = sphi 0, %s199
      %s214 = sphi 0, %s200
      %s218 = sphi 0, %s218
      %s220 = sphi 0, %s218
      %s221 = sphi 0, %s220
      %s235 = sphi 0, %s221
      %s239 = sphi 0, %s239
      %s241 = sphi 0, %s239
      %s242 = sphi 0, %s241
      %s256 = sphi 0, %s242
      %s260 = sphi 0, %s260
      %s262 = sphi 0, %s260
      %s263 = sphi 0, %s262
      %s277 = sphi 0, %s263
      %s281 = sphi 0, %s281
      %s283 = sphi 0, %s281
      %s284 = sphi 0, %s283
      %s298 = sphi 0, %s284
      %s302 = sphi 0, %s302
      %s304 = sphi 0, %s302
      %s305 = sphi 0, %s304
      %s319 = sphi 0, %s305
      %s323 = sphi 0, %s323
      %s325 = sphi 0, %s323
      %s326 = sphi 0, %s325
      %s340 = sphi 0, %s326
      %s346 = sphi 0, %s348
      %s349 = sphi 0, %s346
      %s350 = sphi 0, %s349
      %s366 = sphi 0, %s350
      %s372 = sphi 0, %s374
      %s375 = sphi 0, %s372
      %s376 = sphi 0, %s375
      %s392 = sphi 0, %s376
    $region4: #{tpu_custom_call.1} parent=1 // loop_header_branch
      %35 = sbr.rel (%p33) target = $region8
    $region5: #{tpu_custom_call.1} parent=1 // loop_body
      %s37 = ssub.s32 %s32, 1
      %s38 = ssub.s32 %s32, 2
      %s39 = sadd.s32 %s32, 1
      %s40 = ssub.s32 %s32, %s39
      %p41 = scmp.eq.s32.totalorder %s40, 0
      %s43 = sadd.s32 %s42, 1
      %s44 = scalar_select %p41, %s42, %s43
      %p47 = pneg %p41
      %p48 = scmp.eq.s32.totalorder %s32, 1
      %p49 = por %p47, %p48
      %p50 = scmp.ne.s32.totalorder %s42, %s45
      %p51 = scmp.eq.s32.totalorder %s32, 0
      %p52 = por %p50, %p51
      %p53 = scmp.ne.s32.totalorder %s42, %s45
      %p54 = scmp.eq.s32.totalorder %s37, 1
      %p55 = por %p53, %p54
      %p56 = scmp.ne.s32.totalorder %s45, %s46
      %p57 = scmp.eq.s32.totalorder %s37, 0
      %p58 = por %p56, %p57
      %p59 = scmp.ne.s32.totalorder %s45, %s46
      %p60 = scmp.eq.s32.totalorder %s38, 1
      %p61 = por %p59, %p60
      %p63 = scmp.ne.s32.totalorder %s46, %s62
      %p64 = scmp.eq.s32.totalorder %s38, 0
      %p65 = por %p63, %p64
      %s66 = ssub.s32 %s32, %s39
      %p67 = scmp.eq.s32.totalorder %s66, 0
      %s69 = sadd.s32 %s68, 1
      %s70 = scalar_select %p67, %s68, %s69
      %p73 = pneg %p67
      %p74 = scmp.eq.s32.totalorder %s32, 1
      %p75 = por %p73, %p74
      %p76 = scmp.ne.s32.totalorder %s68, %s71
      %p77 = scmp.eq.s32.totalorder %s32, 0
      %p78 = por %p76, %p77
      %p79 = scmp.ne.s32.totalorder %s68, %s71
      %p80 = scmp.eq.s32.totalorder %s37, 1
      %p81 = por %p79, %p80
      %p82 = scmp.ne.s32.totalorder %s71, %s72
      %p83 = scmp.eq.s32.totalorder %s37, 0
      %p84 = por %p82, %p83
      %p85 = scmp.ne.s32.totalorder %s71, %s72
      %p86 = scmp.eq.s32.totalorder %s38, 1
      %p87 = por %p85, %p86
      %p89 = scmp.ne.s32.totalorder %s72, %s88
      %p90 = scmp.eq.s32.totalorder %s38, 0
      %p91 = por %p89, %p90
      %s93 = sadd.s32 %s92, 1
      %p96 = scmp.eq.s32.totalorder %s32, 1
      %p97 = scmp.ne.s32.totalorder %s92, %s94
      %p98 = scmp.eq.s32.totalorder %s32, 0
      %p99 = por %p97, %p98
      %p100 = scmp.ne.s32.totalorder %s92, %s94
      %p101 = scmp.eq.s32.totalorder %s37, 1
      %p102 = por %p100, %p101
      %p103 = scmp.ne.s32.totalorder %s94, %s95
      %p104 = scmp.eq.s32.totalorder %s37, 0
      %p105 = por %p103, %p104
      %p106 = scmp.ne.s32.totalorder %s94, %s95
      %p107 = scmp.eq.s32.totalorder %s38, 1
      %p108 = por %p106, %p107
      %p110 = scmp.ne.s32.totalorder %s95, %s109
      %p111 = scmp.eq.s32.totalorder %s38, 0
      %p112 = por %p110, %p111
      %s114 = sadd.s32 %s113, 1
      %p117 = scmp.eq.s32.totalorder %s32, 1
      %p118 = scmp.ne.s32.totalorder %s113, %s115
      %p119 = scmp.eq.s32.totalorder %s32, 0
      %p120 = por %p118, %p119
      %p121 = scmp.ne.s32.totalorder %s113, %s115
      %p122 = scmp.eq.s32.totalorder %s37, 1
      %p123 = por %p121, %p122
      %p124 = scmp.ne.s32.totalorder %s115, %s116
      %p125 = scmp.eq.s32.totalorder %s37, 0
      %p126 = por %p124, %p125
      %p127 = scmp.ne.s32.totalorder %s115, %s116
      %p128 = scmp.eq.s32.totalorder %s38, 1
      %p129 = por %p127, %p128
      %p131 = scmp.ne.s32.totalorder %s116, %s130
      %p132 = scmp.eq.s32.totalorder %s38, 0
      %p133 = por %p131, %p132
      %s135 = sadd.s32 %s134, 1
      %p138 = scmp.eq.s32.totalorder %s32, 1
      %p139 = scmp.ne.s32.totalorder %s134, %s136
      %p140 = scmp.eq.s32.totalorder %s32, 0
      %p141 = por %p139, %p140
      %p142 = scmp.ne.s32.totalorder %s134, %s136
      %p143 = scmp.eq.s32.totalorder %s37, 1
      %p144 = por %p142, %p143
      %p145 = scmp.ne.s32.totalorder %s136, %s137
      %p146 = scmp.eq.s32.totalorder %s37, 0
      %p147 = por %p145, %p146
      %p148 = scmp.ne.s32.totalorder %s136, %s137
      %p149 = scmp.eq.s32.totalorder %s38, 1
      %p150 = por %p148, %p149
      %p152 = scmp.ne.s32.totalorder %s137, %s151
      %p153 = scmp.eq.s32.totalorder %s38, 0
      %p154 = por %p152, %p153
      %s156 = sadd.s32 %s155, 1
      %p159 = scmp.eq.s32.totalorder %s32, 1
      %p160 = scmp.ne.s32.totalorder %s155, %s157
      %p161 = scmp.eq.s32.totalorder %s32, 0
      %p162 = por %p160, %p161
      %p163 = scmp.ne.s32.totalorder %s155, %s157
      %p164 = scmp.eq.s32.totalorder %s37, 1
      %p165 = por %p163, %p164
      %p166 = scmp.ne.s32.totalorder %s157, %s158
      %p167 = scmp.eq.s32.totalorder %s37, 0
      %p168 = por %p166, %p167
      %p169 = scmp.ne.s32.totalorder %s157, %s158
      %p170 = scmp.eq.s32.totalorder %s38, 1
      %p171 = por %p169, %p170
      %p173 = scmp.ne.s32.totalorder %s158, %s172
      %p174 = scmp.eq.s32.totalorder %s38, 0
      %p175 = por %p173, %p174
      %s177 = sadd.s32 %s176, 1
      %p180 = scmp.eq.s32.totalorder %s32, 1
      %p181 = scmp.ne.s32.totalorder %s176, %s178
      %p182 = scmp.eq.s32.totalorder %s32, 0
      %p183 = por %p181, %p182
      %p184 = scmp.ne.s32.totalorder %s176, %s178
      %p185 = scmp.eq.s32.totalorder %s37, 1
      %p186 = por %p184, %p185
      %p187 = scmp.ne.s32.totalorder %s178, %s179
      %p188 = scmp.eq.s32.totalorder %s37, 0
      %p189 = por %p187, %p188
      %p190 = scmp.ne.s32.totalorder %s178, %s179
      %p191 = scmp.eq.s32.totalorder %s38, 1
      %p192 = por %p190, %p191
      %p194 = scmp.ne.s32.totalorder %s179, %s193
      %p195 = scmp.eq.s32.totalorder %s38, 0
      %p196 = por %p194, %p195
      %s198 = sadd.s32 %s197, 1
      %p201 = scmp.eq.s32.totalorder %s32, 1
      %p202 = scmp.ne.s32.totalorder %s197, %s199
      %p203 = scmp.eq.s32.totalorder %s32, 0
      %p204 = por %p202, %p203
      %p205 = scmp.ne.s32.totalorder %s197, %s199
      %p206 = scmp.eq.s32.totalorder %s37, 1
      %p207 = por %p205, %p206
      %p208 = scmp.ne.s32.totalorder %s199, %s200
      %p209 = scmp.eq.s32.totalorder %s37, 0
      %p210 = por %p208, %p209
      %p211 = scmp.ne.s32.totalorder %s199, %s200
      %p212 = scmp.eq.s32.totalorder %s38, 1
      %p213 = por %p211, %p212
      %p215 = scmp.ne.s32.totalorder %s200, %s214
      %p216 = scmp.eq.s32.totalorder %s38, 0
      %p217 = por %p215, %p216
      %s219 = sadd.s32 %s218, 1
      %p222 = scmp.eq.s32.totalorder %s32, 1
      %p223 = scmp.ne.s32.totalorder %s218, %s220
      %p224 = scmp.eq.s32.totalorder %s32, 0
      %p225 = por %p223, %p224
      %p226 = scmp.ne.s32.totalorder %s218, %s220
      %p227 = scmp.eq.s32.totalorder %s37, 1
      %p228 = por %p226, %p227
      %p229 = scmp.ne.s32.totalorder %s220, %s221
      %p230 = scmp.eq.s32.totalorder %s37, 0
      %p231 = por %p229, %p230
      %p232 = scmp.ne.s32.totalorder %s220, %s221
      %p233 = scmp.eq.s32.totalorder %s38, 1
      %p234 = por %p232, %p233
      %p236 = scmp.ne.s32.totalorder %s221, %s235
      %p237 = scmp.eq.s32.totalorder %s38, 0
      %p238 = por %p236, %p237
      %s240 = sadd.s32 %s239, 1
      %p243 = scmp.eq.s32.totalorder %s32, 1
      %p244 = scmp.ne.s32.totalorder %s239, %s241
      %p245 = scmp.eq.s32.totalorder %s32, 0
      %p246 = por %p244, %p245
      %p247 = scmp.ne.s32.totalorder %s239, %s241
      %p248 = scmp.eq.s32.totalorder %s37, 1
      %p249 = por %p247, %p248
      %p250 = scmp.ne.s32.totalorder %s241, %s242
      %p251 = scmp.eq.s32.totalorder %s37, 0
      %p252 = por %p250, %p251
      %p253 = scmp.ne.s32.totalorder %s241, %s242
      %p254 = scmp.eq.s32.totalorder %s38, 1
      %p255 = por %p253, %p254
      %p257 = scmp.ne.s32.totalorder %s242, %s256
      %p258 = scmp.eq.s32.totalorder %s38, 0
      %p259 = por %p257, %p258
      %s261 = sadd.s32 %s260, 1
      %p264 = scmp.eq.s32.totalorder %s32, 1
      %p265 = scmp.ne.s32.totalorder %s260, %s262
      %p266 = scmp.eq.s32.totalorder %s32, 0
      %p267 = por %p265, %p266
      %p268 = scmp.ne.s32.totalorder %s260, %s262
      %p269 = scmp.eq.s32.totalorder %s37, 1
      %p270 = por %p268, %p269
      %p271 = scmp.ne.s32.totalorder %s262, %s263
      %p272 = scmp.eq.s32.totalorder %s37, 0
      %p273 = por %p271, %p272
      %p274 = scmp.ne.s32.totalorder %s262, %s263
      %p275 = scmp.eq.s32.totalorder %s38, 1
      %p276 = por %p274, %p275
      %p278 = scmp.ne.s32.totalorder %s263, %s277
      %p279 = scmp.eq.s32.totalorder %s38, 0
      %p280 = por %p278, %p279
      %s282 = sadd.s32 %s281, 1
      %p285 = scmp.eq.s32.totalorder %s32, 1
      %p286 = scmp.ne.s32.totalorder %s281, %s283
      %p287 = scmp.eq.s32.totalorder %s32, 0
      %p288 = por %p286, %p287
      %p289 = scmp.ne.s32.totalorder %s281, %s283
      %p290 = scmp.eq.s32.totalorder %s37, 1
      %p291 = por %p289, %p290
      %p292 = scmp.ne.s32.totalorder %s283, %s284
      %p293 = scmp.eq.s32.totalorder %s37, 0
      %p294 = por %p292, %p293
      %p295 = scmp.ne.s32.totalorder %s283, %s284
      %p296 = scmp.eq.s32.totalorder %s38, 1
      %p297 = por %p295, %p296
      %p299 = scmp.ne.s32.totalorder %s284, %s298
      %p300 = scmp.eq.s32.totalorder %s38, 0
      %p301 = por %p299, %p300
      %s303 = sadd.s32 %s302, 1
      %p306 = scmp.eq.s32.totalorder %s32, 1
      %p307 = scmp.ne.s32.totalorder %s302, %s304
      %p308 = scmp.eq.s32.totalorder %s32, 0
      %p309 = por %p307, %p308
      %p310 = scmp.ne.s32.totalorder %s302, %s304
      %p311 = scmp.eq.s32.totalorder %s37, 1
      %p312 = por %p310, %p311
      %p313 = scmp.ne.s32.totalorder %s304, %s305
      %p314 = scmp.eq.s32.totalorder %s37, 0
      %p315 = por %p313, %p314
      %p316 = scmp.ne.s32.totalorder %s304, %s305
      %p317 = scmp.eq.s32.totalorder %s38, 1
      %p318 = por %p316, %p317
      %p320 = scmp.ne.s32.totalorder %s305, %s319
      %p321 = scmp.eq.s32.totalorder %s38, 0
      %p322 = por %p320, %p321
      %s324 = sadd.s32 %s323, 1
      %p327 = scmp.eq.s32.totalorder %s32, 1
      %p328 = scmp.ne.s32.totalorder %s323, %s325
      %p329 = scmp.eq.s32.totalorder %s32, 0
      %p330 = por %p328, %p329
      %p331 = scmp.ne.s32.totalorder %s323, %s325
      %p332 = scmp.eq.s32.totalorder %s37, 1
      %p333 = por %p331, %p332
      %p334 = scmp.ne.s32.totalorder %s325, %s326
      %p335 = scmp.eq.s32.totalorder %s37, 0
      %p336 = por %p334, %p335
      %p337 = scmp.ne.s32.totalorder %s325, %s326
      %p338 = scmp.eq.s32.totalorder %s38, 1
      %p339 = por %p337, %p338
      %p341 = scmp.ne.s32.totalorder %s326, %s340
      %p342 = scmp.eq.s32.totalorder %s38, 0
      %p343 = por %p341, %p342
      %s344 = ssub.s32 %s32, %s39
      %p345 = scmp.eq.s32.totalorder %s344, 0
      %s347 = sadd.s32 %s346, 1
      %s348 = scalar_select %p345, %s346, %s347
      %p351 = pneg %p345
      %p352 = scmp.eq.s32.totalorder %s32, 1
      %p353 = por %p351, %p352
      %p354 = scmp.ne.s32.totalorder %s346, %s349
      %p355 = scmp.eq.s32.totalorder %s32, 0
      %p356 = por %p354, %p355
      %p357 = scmp.ne.s32.totalorder %s346, %s349
      %p358 = scmp.eq.s32.totalorder %s37, 1
      %p359 = por %p357, %p358
      %p360 = scmp.ne.s32.totalorder %s349, %s350
      %p361 = scmp.eq.s32.totalorder %s37, 0
      %p362 = por %p360, %p361
      %p363 = scmp.ne.s32.totalorder %s349, %s350
      %p364 = scmp.eq.s32.totalorder %s38, 1
      %p365 = por %p363, %p364
      %p367 = scmp.ne.s32.totalorder %s350, %s366
      %p368 = scmp.eq.s32.totalorder %s38, 0
      %p369 = por %p367, %p368
      %s370 = ssub.s32 %s32, %s39
      %p371 = scmp.eq.s32.totalorder %s370, 0
      %s373 = sadd.s32 %s372, 1
      %s374 = scalar_select %p371, %s372, %s373
      %p377 = pneg %p371
      %p378 = scmp.eq.s32.totalorder %s32, 1
      %p379 = por %p377, %p378
      %p380 = scmp.ne.s32.totalorder %s372, %s375
      %p381 = scmp.eq.s32.totalorder %s32, 0
      %p382 = por %p380, %p381
      %p383 = scmp.ne.s32.totalorder %s372, %s375
      %p384 = scmp.eq.s32.totalorder %s37, 1
      %p385 = por %p383, %p384
      %p386 = scmp.ne.s32.totalorder %s375, %s376
      %p387 = scmp.eq.s32.totalorder %s37, 0
      %p388 = por %p386, %p387
      %p389 = scmp.ne.s32.totalorder %s375, %s376
      %p390 = scmp.eq.s32.totalorder %s38, 1
      %p391 = por %p389, %p390
      %p393 = scmp.ne.s32.totalorder %s376, %s392
      %p394 = scmp.eq.s32.totalorder %s38, 0
      %p395 = por %p393, %p394
      %p396 = scmp.le.s32.totalorder 1, %s32
      %p397 = scmp.lt.s32.totalorder %s32, 3
      %p398 = pnand %p396, %p397
      %p399 = pneg %p398
      // Predicated region
      $region9: #{tpu_custom_call.1} parent=5 // pred_check
        _
      $region10: #{tpu_custom_call.1} parent=5 // pred_check_branch
        %401 = sbr.rel (%p398) target = $region12
      $region11: #{tpu_custom_call.1} parent=5 // pred_region
        %s402 = ssub.s32 %s32, 1
        // Predicated region
        $region13: #{tpu_custom_call.1} parent=11 // pred_check
          %p403 = pneg %p105
        $region14: #{tpu_custom_call.1} parent=11 // pred_check_branch
          %405 = sbr.rel (%p403) target = $region16
        $region15: #{tpu_custom_call.1} parent=11 // pred_region
          _
        $region16: #{tpu_custom_call.1} parent=11 // pred_fallthru
          _
        // Predicated region
        $region17: #{tpu_custom_call.1} parent=11 // pred_check
          %p406 = pneg %p126
        $region18: #{tpu_custom_call.1} parent=11 // pred_check_branch
          %408 = sbr.rel (%p406) target = $region20
        $region19: #{tpu_custom_call.1} parent=11 // pred_region
          _
        $region20: #{tpu_custom_call.1} parent=11 // pred_fallthru
          _
        // Predicated region
        $region21: #{tpu_custom_call.1} parent=11 // pred_check
          %p409 = pneg %p147
        $region22: #{tpu_custom_call.1} parent=11 // pred_check_branch
          %411 = sbr.rel (%p409) target = $region24
        $region23: #{tpu_custom_call.1} parent=11 // pred_region
          _
        $region24: #{tpu_custom_call.1} parent=11 // pred_fallthru
          _
        // Predicated region
        $region25: #{tpu_custom_call.1} parent=11 // pred_check
          %p412 = pneg %p168
        $region26: #{tpu_custom_call.1} parent=11 // pred_check_branch
          %414 = sbr.rel (%p412) target = $region28
        $region27: #{tpu_custom_call.1} parent=11 // pred_region
          _
        $region28: #{tpu_custom_call.1} parent=11 // pred_fallthru
          _
        // Predicated region
        $region29: #{tpu_custom_call.1} parent=11 // pred_check
          %p415 = pneg %p189
        $region30: #{tpu_custom_call.1} parent=11 // pred_check_branch
          %417 = sbr.rel (%p415) target = $region32
        $region31: #{tpu_custom_call.1} parent=11 // pred_region
          _
        $region32: #{tpu_custom_call.1} parent=11 // pred_fallthru
          _
        // Predicated region
        $region33: #{tpu_custom_call.1} parent=11 // pred_check
          %p418 = pneg %p210
        $region34: #{tpu_custom_call.1} parent=11 // pred_check_branch
          %420 = sbr.rel (%p418) target = $region36
        $region35: #{tpu_custom_call.1} parent=11 // pred_region
          _
        $region36: #{tpu_custom_call.1} parent=11 // pred_fallthru
          _
        // Predicated region
        $region37: #{tpu_custom_call.1} parent=11 // pred_check
          %p421 = pneg %p231
        $region38: #{tpu_custom_call.1} parent=11 // pred_check_branch
          %423 = sbr.rel (%p421) target = $region40
        $region39: #{tpu_custom_call.1} parent=11 // pred_region
          _
        $region40: #{tpu_custom_call.1} parent=11 // pred_fallthru
          _
        // Predicated region
        $region41: #{tpu_custom_call.1} parent=11 // pred_check
          %p424 = pneg %p252
        $region42: #{tpu_custom_call.1} parent=11 // pred_check_branch
          %426 = sbr.rel (%p424) target = $region44
        $region43: #{tpu_custom_call.1} parent=11 // pred_region
          _
        $region44: #{tpu_custom_call.1} parent=11 // pred_fallthru
          _
        // Predicated region
        $region45: #{tpu_custom_call.1} parent=11 // pred_check
          %p427 = pneg %p273
        $region46: #{tpu_custom_call.1} parent=11 // pred_check_branch
          %429 = sbr.rel (%p427) target = $region48
        $region47: #{tpu_custom_call.1} parent=11 // pred_region
          _
        $region48: #{tpu_custom_call.1} parent=11 // pred_fallthru
          _
        // Predicated region
        $region49: #{tpu_custom_call.1} parent=11 // pred_check
          %p430 = pneg %p294
        $region50: #{tpu_custom_call.1} parent=11 // pred_check_branch
          %432 = sbr.rel (%p430) target = $region52
        $region51: #{tpu_custom_call.1} parent=11 // pred_region
          _
        $region52: #{tpu_custom_call.1} parent=11 // pred_fallthru
          _
        // Predicated region
        $region53: #{tpu_custom_call.1} parent=11 // pred_check
          %p433 = pneg %p315
        $region54: #{tpu_custom_call.1} parent=11 // pred_check_branch
          %435 = sbr.rel (%p433) target = $region56
        $region55: #{tpu_custom_call.1} parent=11 // pred_region
          _
        $region56: #{tpu_custom_call.1} parent=11 // pred_fallthru
          _
        // Predicated region
        $region57: #{tpu_custom_call.1} parent=11 // pred_check
          %p436 = pneg %p336
        $region58: #{tpu_custom_call.1} parent=11 // pred_check_branch
          %438 = sbr.rel (%p436) target = $region60
        $region59: #{tpu_custom_call.1} parent=11 // pred_region
          %s440 = ssub.s32 16, 16
          %441 = vsyncadd [#allocation6], %s440
          %s443 = sshll.u32 [#allocation5], 4
          %s444 = int_to_ptr.vmem [resolvable:$true] %s443
          %446 = dma.hbm_to_vmem [thread:$0]  %s13, 16, %s444, [#allocation6]
        $region60: #{tpu_custom_call.1} parent=11 // pred_fallthru
          _
      $region12: #{tpu_custom_call.1} parent=5 // pred_fallthru
        _
      %p447 = scmp.lt.s32.totalorder %s32, 2
      // Predicated region
      $region61: #{tpu_custom_call.1} parent=5 // pred_check
        %p448 = pneg %p447
      $region62: #{tpu_custom_call.1} parent=5 // pred_check_branch
        %450 = sbr.rel (%p448) target = $region64
      $region63: #{tpu_custom_call.1} parent=5 // pred_region
        // Predicated region
        $region65: #{tpu_custom_call.1} parent=63 // pred_check
          %p451 = pneg %p52
        $region66: #{tpu_custom_call.1} parent=63 // pred_check_branch
          %453 = sbr.rel (%p451) target = $region68
        $region67: #{tpu_custom_call.1} parent=63 // pred_region
          %s454 = sand.u32 %s42, 1
          %s455 = scalar_lea.sflag [#allocation3], %s454
          %s456 = sand.u32 %s42, 1
          %s457 = smul.addr %s456, 8
          %s458 = scalar_lea.vmem [#allocation2], %s457
          %s460 = ssub.s32 128, 128
          %461 = vsyncadd %s455, %s460
          %s462 = smul.addr %s32, 128
          %s463 = scalar_lea.hbm %s0, %s462
          %s465 = sshll.u32 %s458, 4
          %s466 = int_to_ptr.vmem [resolvable:$true] %s465
          %468 = dma.hbm_to_vmem [thread:$0]  %s463, 128, %s466, %s455
        $region68: #{tpu_custom_call.1} parent=63 // pred_fallthru
          _
        // Predicated region
        $region69: #{tpu_custom_call.1} parent=63 // pred_check
          %p469 = pneg %p78
        $region70: #{tpu_custom_call.1} parent=63 // pred_check_branch
          %471 = sbr.rel (%p469) target = $region72
        $region71: #{tpu_custom_call.1} parent=63 // pred_region
          %p472 = scmp.lt.s32.totalorder %s32, 1
          %s473 = scalar_select %p472, %s32, 1
          %s474 = smul.addr %s473, 8
          %s475 = scalar_lea.vmem %s1, %s474
        $region72: #{tpu_custom_call.1} parent=63 // pred_fallthru
          _
      $region64: #{tpu_custom_call.1} parent=5 // pred_fallthru
        _
      %p476 = scmp.le.s32.totalorder 1, %s32
      %p477 = scmp.lt.s32.totalorder %s32, 3
      %p478 = pnand %p476, %p477
      %p479 = pneg %p478
      // Predicated region
      $region73: #{tpu_custom_call.1} parent=5 // pred_check
        _
      $region74: #{tpu_custom_call.1} parent=5 // pred_check_branch
        %481 = sbr.rel (%p478) target = $region76
      $region75: #{tpu_custom_call.1} parent=5 // pred_region
        %s482 = ssub.s32 %s32, 1
        %s483 = sand.u32 %s45, 1
        %s484 = scalar_lea.sflag [#allocation3], %s483
        %s485 = sand.u32 %s45, 1
        %s486 = smul.addr %s485, 8
        %s487 = scalar_lea.vmem [#allocation2], %s486
        // Predicated region
        $region77: #{tpu_custom_call.1} parent=75 // pred_check
          %p488 = pneg %p58
        $region78: #{tpu_custom_call.1} parent=75 // pred_check_branch
          %490 = sbr.rel (%p488) target = $region80
        $region79: #{tpu_custom_call.1} parent=75 // pred_region
          %491 = dma.done %s484, 128
        $region80: #{tpu_custom_call.1} parent=75 // pred_fallthru
          _
        // Predicated region
        $region81: #{tpu_custom_call.1} parent=75 // pred_check
          %p492 = pneg %p336
        $region82: #{tpu_custom_call.1} parent=75 // pred_check_branch
          %494 = sbr.rel (%p492) target = $region84
        $region83: #{tpu_custom_call.1} parent=75 // pred_region
          %495 = dma.done [#allocation6], 16
        $region84: #{tpu_custom_call.1} parent=75 // pred_fallthru
          _
        %s496 = sand.u32 %s45, 1
        %s497 = scalar_lea.sflag [#allocation3], %s496
        %s498 = sand.u32 %s45, 1
        %s499 = smul.addr %s498, 8
        %s500 = scalar_lea.vmem [#allocation2], %s499
        %p501 = pneg %p58
        %p502 = pneg %p55
        %p503 = scmp.lt.s32.totalorder %s37, 1
        %s504 = scalar_select %p503, %s37, 1
        %s505 = smul.addr %s504, 8
        %s506 = scalar_lea.vmem %s1, %s505
        %p507 = pneg %p84
        %p508 = pneg %p81
        %p509 = pneg %p105
        %p510 = pneg %p102
        %p511 = pneg %p126
        %p512 = pneg %p123
        %p513 = pneg %p147
        %p514 = pneg %p144
        %p515 = pneg %p168
        %p516 = pneg %p165
        %p517 = pneg %p189
        %p518 = pneg %p186
        %p519 = pneg %p210
        %p520 = pneg %p207
        %p521 = pneg %p231
        %p522 = pneg %p228
        %p523 = pneg %p252
        %p524 = pneg %p249
        %p525 = pneg %p273
        %p526 = pneg %p270
        %p527 = pneg %p294
        %p528 = pneg %p291
        %p529 = pneg %p315
        %p530 = pneg %p312
        %p531 = pneg %p336
        %p532 = pneg %p333
        %p533 = pneg %p362
        %p534 = pneg %p359
        %s535 = sand.u32 %s349, 1
        %s536 = scalar_lea.sflag [#allocation4], %s535
        %s537 = sand.u32 %s349, 1
        %s538 = smul.addr %s537, 8
        %s539 = scalar_lea.vmem [#allocation7], %s538
        %p540 = pneg %p388
        %p541 = pneg %p385
        %s542 = sand.u32 %s375, 1
        %s543 = scalar_lea.sflag [#allocation9], %s542
        %s544 = sand.u32 %s375, 1
        %s545 = smul.addr %s544, 32
        %s546 = scalar_lea.vmem [#allocation8], %s545
        %p547 = scmp.lt.s32.totalorder %s37, 1
        %s548 = scalar_select %p547, %s37, 1
        %s549 = smul.addr %s548, 8
        %s550 = scalar_lea.vmem %s1, %s549
        %v551 = vld [vmem:[%s487] sm:$0xff]
        %v552 = vld [vmem:[%s2] sm:$0x1]
        %v553 = vld [vmem:[%s3] sm:$0x1]
        %vm554 = vcmask 261120
        %v555 = vsel %vm554, %v551, 0.0
        %556 = vadd.xlane.f32.xlu0 %v555
        %v557 = vpop.xlane.xlu0 %556
        %v558 = vrcp.pop 32.0
        %v559 = vmul.f32 %v557, %v558
        %v560 = vsub.f32 %v551, %v559
        %v561 = vmul.f32 %v560, %v560
        %v562 = vsel %vm554, %v561, 0.0
        %563 = vadd.xlane.f32.xlu0 %v562
        %v564 = vpop.xlane.xlu0 %563
        %v565 = vmul.f32 %v564, %v558
        %v566 = vadd.f32 %v565, 1e-05
        %v567 = vrsqrt.pop %v566
        %v568 = vmul.f32 %v560, %v567
        %v570 = vlaneseq
        %v571 = vshrl.u32 %v570, 7
        %v572 = vsub.s32 0, %v571
        %v573 = vrot.slane %v552, %v572
        %v575 = vmul.f32 %v568, %v573
        %v577 = vlaneseq
        %v578 = vshrl.u32 %v577, 7
        %v579 = vsub.s32 0, %v578
        %v580 = vrot.slane %v553, %v579
        %v582 = vadd.f32 %v575, %v580
        %v583 = vld [vmem:[%s4] sm:$0xff]
        %v584 = vld [vmem:[%s4 + $0x8] sm:$0xff]
        %v585 = vld [vmem:[%s4 + $0x10] sm:$0xff]
        %v586 = vld [vmem:[%s4 + $0x18] sm:$0xff]
        %v587 = vld [vmem:[%s4 + $0x20] sm:$0xff]
        %v588 = vld [vmem:[%s4 + $0x28] sm:$0xff]
        %v589 = vld [vmem:[%s4 + $0x30] sm:$0xff]
        %v590 = vld [vmem:[%s4 + $0x38] sm:$0xff]
        %v591 = vld [vmem:[%s4 + $0x40] sm:$0xff]
        %v592 = vld [vmem:[%s4 + $0x48] sm:$0xff]
        %v593 = vld [vmem:[%s4 + $0x50] sm:$0xff]
        %v594 = vld [vmem:[%s4 + $0x58] sm:$0xff]
        %v595 = vld [vmem:[%s5] sm:$0x7]
        %v597 = vlaneseq
        %v598 = vshrl.u32 %v597, 7
        %v599 = vsub.s32 0, %v598
        %v600 = vrot.slane %v595, %v599
        %v601 = vlaneseq
        %v602 = vshrl.u32 %v601, 7
        %v603 = vsub.s32 1, %v602
        %v604 = vrot.slane %v595, %v603
        %v605 = vlaneseq
        %v606 = vshrl.u32 %v605, 7
        %v607 = vsub.s32 2, %v606
        %v608 = vrot.slane %v595, %v607
        %v613 = vsel %vm554, %v582, 0
        %615 = vmatprep.subr.mxu0 0.0
        %616 = vmatpush1.msra.mxu0 0.0
        %617 = vmatprep.subr.mxu0 0.0
        %618 = vmatpush1.msra.mxu0 0.0
        %619 = vmatprep.subr.mxu0 0.0
        %620 = vmatpush1.msra.mxu0 0.0
        %621 = vmatprep.subr.mxu0 0.0
        %622 = vmatpush1.msra.mxu0 0.0
        %623 = vmatprep.subr.mxu0 0.0
        %624 = vmatpush1.msra.mxu0 0.0
        %625 = vmatprep.subr.mxu0 0.0
        %626 = vmatpush1.msra.mxu0 0.0
        %627 = vmatprep.subr.mxu0 0.0
        %628 = vmatpush1.msra.mxu0 0.0
        %629 = vmatprep.subr.mxu0 0.0
        %630 = vmatpush1.msra.mxu0 0.0
        %631 = vmatprep.subr.mxu0 0.0
        %632 = vmatpush1.msra.mxu0 0.0
        %633 = vmatprep.subr.mxu0 0.0
        %634 = vmatpush1.msra.mxu0 0.0
        %635 = vmatprep.subr.mxu0 0.0
        %636 = vmatpush1.msra.mxu0 0.0
        %637 = vmatprep.subr.mxu0 0.0
        %638 = vmatpush1.msra.mxu0 0.0
        %639 = vmatprep.subr.mxu0 %v593
        %640 = vmatpush1.msra.mxu0 %v592
        %641 = vmatprep.subr.mxu0 %v590
        %642 = vmatpush1.msra.mxu0 %v589
        %643 = vmatprep.subr.mxu0 %v587
        %644 = vmatpush1.msra.mxu0 %v586
        %645 = vmatprep.subr.mxu0 %v584
        %646 = vmatpush1.msra.mxu0 %v583
        %647 = vmatprep.subr.mxu0 0.0
        %648 = vmatpush2.msra.mxu0 0.0
        %649 = vmatprep.subr.mxu0 0.0
        %650 = vmatpush2.msra.mxu0 0.0
        %651 = vmatprep.subr.mxu0 0.0
        %652 = vmatpush2.msra.mxu0 0.0
        %653 = vmatprep.subr.mxu0 0.0
        %654 = vmatpush2.msra.mxu0 0.0
        %655 = vmatprep.subr.mxu0 0.0
        %656 = vmatpush2.msra.mxu0 0.0
        %657 = vmatprep.subr.mxu0 0.0
        %658 = vmatpush2.msra.mxu0 0.0
        %659 = vmatprep.subr.mxu0 0.0
        %660 = vmatpush2.msra.mxu0 0.0
        %661 = vmatprep.subr.mxu0 0.0
        %662 = vmatpush2.msra.mxu0 0.0
        %663 = vmatprep.subr.mxu0 0.0
        %664 = vmatpush2.msra.mxu0 0.0
        %665 = vmatprep.subr.mxu0 0.0
        %666 = vmatpush2.msra.mxu0 0.0
        %667 = vmatprep.subr.mxu0 0.0
        %668 = vmatpush2.msra.mxu0 0.0
        %669 = vmatprep.subr.mxu0 0.0
        %670 = vmatpush2.msra.mxu0 0.0
        %671 = vmatprep.subr.mxu0 0.0
        %672 = vmatpush2.msra.mxu0 0.0
        %673 = vmatprep.subr.mxu0 0.0
        %674 = vmatpush2.msra.mxu0 0.0
        %675 = vmatprep.subr.mxu0 0.0
        %676 = vmatpush2.msra.mxu0 0.0
        %677 = vmatprep.subr.mxu0 0.0
        %678 = vmatpush2.msra.mxu0 0.0
        %679 = vmatprep.mubr.f32.mxu0 0.0
        %680 = vmatmul.mubr.f32.gmra.mxu0 %v613
        %v681 = vpop.f32.mrf.mxu0
        %v682 = vadd.f32 %v600, %v681
        %v683 = vpop.f32.mrf.mxu0
        %v684 = vadd.f32 %v604, %v683
        %685 = vdwg.mxu0
        %686 = vmatprep.subr.mxu0 0.0
        %687 = vmatpush1.msra.mxu0 0.0
        %688 = vmatprep.subr.mxu0 0.0
        %689 = vmatpush1.msra.mxu0 0.0
        %690 = vmatprep.subr.mxu0 0.0
        %691 = vmatpush1.msra.mxu0 0.0
        %692 = vmatprep.subr.mxu0 0.0
        %693 = vmatpush1.msra.mxu0 0.0
        %694 = vmatprep.subr.mxu0 0.0
        %695 = vmatpush1.msra.mxu0 0.0
        %696 = vmatprep.subr.mxu0 0.0
        %697 = vmatpush1.msra.mxu0 0.0
        %698 = vmatprep.subr.mxu0 0.0
        %699 = vmatpush1.msra.mxu0 0.0
        %700 = vmatprep.subr.mxu0 0.0
        %701 = vmatpush1.msra.mxu0 0.0
        %702 = vmatprep.subr.mxu0 0.0
        %703 = vmatpush1.msra.mxu0 0.0
        %704 = vmatprep.subr.mxu0 0.0
        %705 = vmatpush1.msra.mxu0 0.0
        %706 = vmatprep.subr.mxu0 0.0
        %707 = vmatpush1.msra.mxu0 0.0
        %708 = vmatprep.subr.mxu0 0.0
        %709 = vmatpush1.msra.mxu0 0.0
        %710 = vmatprep.subr.mxu0 0.0
        %711 = vmatpush1.msra.mxu0 %v594
        %712 = vmatprep.subr.mxu0 0.0
        %713 = vmatpush1.msra.mxu0 %v591
        %714 = vmatprep.subr.mxu0 0.0
        %715 = vmatpush1.msra.mxu0 %v588
        %716 = vmatprep.subr.mxu0 0.0
        %717 = vmatpush1.msra.mxu0 %v585
        %718 = vmatprep.subr.mxu0 0.0
        %719 = vmatpush2.msra.mxu0 0.0
        %720 = vmatprep.subr.mxu0 0.0
        %721 = vmatpush2.msra.mxu0 0.0
        %722 = vmatprep.subr.mxu0 0.0
        %723 = vmatpush2.msra.mxu0 0.0
        %724 = vmatprep.subr.mxu0 0.0
        %725 = vmatpush2.msra.mxu0 0.0
        %726 = vmatprep.subr.mxu0 0.0
        %727 = vmatpush2.msra.mxu0 0.0
        %728 = vmatprep.subr.mxu0 0.0
        %729 = vmatpush2.msra.mxu0 0.0
        %730 = vmatprep.subr.mxu0 0.0
        %731 = vmatpush2.msra.mxu0 0.0
        %732 = vmatprep.subr.mxu0 0.0
        %733 = vmatpush2.msra.mxu0 0.0
        %734 = vmatprep.subr.mxu0 0.0
        %735 = vmatpush2.msra.mxu0 0.0
        %736 = vmatprep.subr.mxu0 0.0
        %737 = vmatpush2.msra.mxu0 0.0
        %738 = vmatprep.subr.mxu0 0.0
        %739 = vmatpush2.msra.mxu0 0.0
        %740 = vmatprep.subr.mxu0 0.0
        %741 = vmatpush2.msra.mxu0 0.0
        %742 = vmatprep.subr.mxu0 0.0
        %743 = vmatpush2.msra.mxu0 0.0
        %744 = vmatprep.subr.mxu0 0.0
        %745 = vmatpush2.msra.mxu0 0.0
        %746 = vmatprep.subr.mxu0 0.0
        %747 = vmatpush2.msra.mxu0 0.0
        %748 = vmatprep.subr.mxu0 0.0
        %749 = vmatpush2.msra.mxu0 0.0
        %750 = vmatprep.mubr.f32.mxu0 0.0
        %751 = vmatmul.mubr.f32.gmra.mxu0 %v613
        %v752 = vpop.f32.mrf.mxu0
        %v753 = vadd.f32 %v608, %v752
        %v754 = vpop.f32.mrf.mxu0
        %755 = vdwg.mxu0
        %v756 = vld [vmem:[%s550] sm:$0xff]
        %758 = vset.pattern.permute.xlu0 0
        %759 = vperm.xlu0 %758, %v756
        %v760 = vpop.permute.xlu0 %759
        %v762 = vmul.f32 %v760, %v682
        %763 = vset.pattern.permute.xlu0 1
        %764 = vperm.xlu0 %763, %v756
        %v765 = vpop.permute.xlu0 %764
        %v767 = vmul.f32 %v765, %v682
        %v768 = vmul.f32 %v765, %v684
        %771 = vrot.lane.b32.xlu0 %v767, 32
        %v772 = vpop.permute.xlu0 %771
        %773 = vrot.lane.b32.xlu0 %v768, 32
        %v774 = vpop.permute.xlu0 %773
        %v775 = vsel %vm554, %v772, %v774
        %v777 = vadd.f32 %v762, %v775
        %778 = vset.pattern.permute.xlu0 2
        %779 = vperm.xlu0 %778, %v756
        %v780 = vpop.permute.xlu0 %779
        %v782 = vmul.f32 %v780, %v684
        %v783 = vmul.f32 %v780, %v753
        %786 = vrot.lane.b32.xlu0 %v782, 64
        %v787 = vpop.permute.xlu0 %786
        %788 = vrot.lane.b32.xlu0 %v783, 64
        %v789 = vpop.permute.xlu0 %788
        %vm790 = vcmask 523264
        %v791 = vsel %vm790, %v787, %v789
        %v793 = vadd.f32 %v777, %v791
        %v794 = vmul.f32 %v793, 0.35355338
        %796 = vrot.lane.b32.xlu0 %v794, 120
        %v797 = vpop.permute.xlu0 %796
        %798 = vrot.lane.b32.xlu0 %v794, 112
        %v799 = vpop.permute.xlu0 %798
        %800 = vrot.lane.b32.xlu0 %v794, 104
        %v801 = vpop.permute.xlu0 %800
        %803 = vrot.lane.b32.xlu0 %v793, 120
        %v804 = vpop.permute.xlu0 %803
        %805 = vrot.lane.b32.xlu0 %v793, 112
        %v806 = vpop.permute.xlu0 %805
        %807 = vrot.lane.b32.xlu0 %v793, 104
        %v808 = vpop.permute.xlu0 %807
        %809 = vrot.lane.b32.xlu0 %v793, 96
        %v810 = vpop.permute.xlu0 %809
        %vm811 = vcmask 64512
        %v812 = vsel %vm811, %v794, 0
        %v814 = vsel %vm811, %v810, 0
        %816 = vmatprep.subr.mxu0 0.0
        %817 = vmatpush1.xpose.msra.mxu0 0.0
        %818 = vmatprep.subr.mxu0 0.0
        %819 = vmatpush1.xpose.msra.mxu0 0.0
        %820 = vmatprep.subr.mxu0 0.0
        %821 = vmatpush1.xpose.msra.mxu0 0.0
        %822 = vmatprep.subr.mxu0 0.0
        %823 = vmatpush1.xpose.msra.mxu0 0.0
        %824 = vmatprep.subr.mxu0 0.0
        %825 = vmatpush1.xpose.msra.mxu0 0.0
        %826 = vmatprep.subr.mxu0 0.0
        %827 = vmatpush1.xpose.msra.mxu0 0.0
        %828 = vmatprep.subr.mxu0 0.0
        %829 = vmatpush1.xpose.msra.mxu0 0.0
        %830 = vmatprep.subr.mxu0 0.0
        %831 = vmatpush1.xpose.msra.mxu0 0.0
        %832 = vmatprep.subr.mxu0 0.0
        %833 = vmatpush1.xpose.msra.mxu0 0.0
        %834 = vmatprep.subr.mxu0 0.0
        %835 = vmatpush1.xpose.msra.mxu0 0.0
        %836 = vmatprep.subr.mxu0 0.0
        %837 = vmatpush1.xpose.msra.mxu0 0.0
        %838 = vmatprep.subr.mxu0 0.0
        %839 = vmatpush1.xpose.msra.mxu0 0.0
        %840 = vmatprep.subr.mxu0 0.0
        %841 = vmatpush1.xpose.msra.mxu0 0.0
        %842 = vmatprep.subr.mxu0 0.0
        %843 = vmatpush1.xpose.msra.mxu0 0.0
        %844 = vmatprep.subr.mxu0 0.0
        %845 = vmatpush1.xpose.msra.mxu0 0.0
        %846 = vmatprep.subr.mxu0 0.0
        %847 = vmatpush1.xpose.msra.mxu0 %v814
        %848 = vmatprep.subr.mxu0 0.0
        %849 = vmatpush2.xpose.msra.mxu0 0.0
        %850 = vmatprep.subr.mxu0 0.0
        %851 = vmatpush2.xpose.msra.mxu0 0.0
        %852 = vmatprep.subr.mxu0 0.0
        %853 = vmatpush2.xpose.msra.mxu0 0.0
        %854 = vmatprep.subr.mxu0 0.0
        %855 = vmatpush2.xpose.msra.mxu0 0.0
        %856 = vmatprep.subr.mxu0 0.0
        %857 = vmatpush2.xpose.msra.mxu0 0.0
        %858 = vmatprep.subr.mxu0 0.0
        %859 = vmatpush2.xpose.msra.mxu0 0.0
        %860 = vmatprep.subr.mxu0 0.0
        %861 = vmatpush2.xpose.msra.mxu0 0.0
        %862 = vmatprep.subr.mxu0 0.0
        %863 = vmatpush2.xpose.msra.mxu0 0.0
        %864 = vmatprep.subr.mxu0 0.0
        %865 = vmatpush2.xpose.msra.mxu0 0.0
        %866 = vmatprep.subr.mxu0 0.0
        %867 = vmatpush2.xpose.msra.mxu0 0.0
        %868 = vmatprep.subr.mxu0 0.0
        %869 = vmatpush2.xpose.msra.mxu0 0.0
        %870 = vmatprep.subr.mxu0 0.0
        %871 = vmatpush2.xpose.msra.mxu0 0.0
        %872 = vmatprep.subr.mxu0 0.0
        %873 = vmatpush2.xpose.msra.mxu0 0.0
        %874 = vmatprep.subr.mxu0 0.0
        %875 = vmatpush2.xpose.msra.mxu0 0.0
        %876 = vmatprep.subr.mxu0 0.0
        %877 = vmatpush2.xpose.msra.mxu0 0.0
        %878 = vmatprep.subr.mxu0 0.0
        %879 = vmatpush2.xpose.msra.mxu0 0.0
        %880 = vmatprep.mubr.f32.mxu0 0.0
        %881 = vmatmul.mubr.f32.gmra.mxu0 %v812
        %v882 = vpop.f32.mrf.mxu0
        %v883 = vadd.f32 0.0, %v882
        %v884 = vpop.f32.mrf.mxu0
        %885 = vdwg.mxu0
        %886 = vrot.lane.b32.xlu0 %v804, 96
        %v887 = vpop.permute.xlu0 %886
        %v888 = vsel %vm811, %v797, 0
        %v890 = vsel %vm811, %v887, 0
        %892 = vmatprep.subr.mxu0 0.0
        %893 = vmatpush1.xpose.msra.mxu0 0.0
        %894 = vmatprep.subr.mxu0 0.0
        %895 = vmatpush1.xpose.msra.mxu0 0.0
        %896 = vmatprep.subr.mxu0 0.0
        %897 = vmatpush1.xpose.msra.mxu0 0.0
        %898 = vmatprep.subr.mxu0 0.0
        %899 = vmatpush1.xpose.msra.mxu0 0.0
        %900 = vmatprep.subr.mxu0 0.0
        %901 = vmatpush1.xpose.msra.mxu0 0.0
        %902 = vmatprep.subr.mxu0 0.0
        %903 = vmatpush1.xpose.msra.mxu0 0.0
        %904 = vmatprep.subr.mxu0 0.0
        %905 = vmatpush1.xpose.msra.mxu0 0.0
        %906 = vmatprep.subr.mxu0 0.0
        %907 = vmatpush1.xpose.msra.mxu0 0.0
        %908 = vmatprep.subr.mxu0 0.0
        %909 = vmatpush1.xpose.msra.mxu0 0.0
        %910 = vmatprep.subr.mxu0 0.0
        %911 = vmatpush1.xpose.msra.mxu0 0.0
        %912 = vmatprep.subr.mxu0 0.0
        %913 = vmatpush1.xpose.msra.mxu0 0.0
        %914 = vmatprep.subr.mxu0 0.0
        %915 = vmatpush1.xpose.msra.mxu0 0.0
        %916 = vmatprep.subr.mxu0 0.0
        %917 = vmatpush1.xpose.msra.mxu0 0.0
        %918 = vmatprep.subr.mxu0 0.0
        %919 = vmatpush1.xpose.msra.mxu0 0.0
        %920 = vmatprep.subr.mxu0 0.0
        %921 = vmatpush1.xpose.msra.mxu0 0.0
        %922 = vmatprep.subr.mxu0 0.0
        %923 = vmatpush1.xpose.msra.mxu0 %v890
        %924 = vmatprep.subr.mxu0 0.0
        %925 = vmatpush2.xpose.msra.mxu0 0.0
        %926 = vmatprep.subr.mxu0 0.0
        %927 = vmatpush2.xpose.msra.mxu0 0.0
        %928 = vmatprep.subr.mxu0 0.0
        %929 = vmatpush2.xpose.msra.mxu0 0.0
        %930 = vmatprep.subr.mxu0 0.0
        %931 = vmatpush2.xpose.msra.mxu0 0.0
        %932 = vmatprep.subr.mxu0 0.0
        %933 = vmatpush2.xpose.msra.mxu0 0.0
        %934 = vmatprep.subr.mxu0 0.0
        %935 = vmatpush2.xpose.msra.mxu0 0.0
        %936 = vmatprep.subr.mxu0 0.0
        %937 = vmatpush2.xpose.msra.mxu0 0.0
        %938 = vmatprep.subr.mxu0 0.0
        %939 = vmatpush2.xpose.msra.mxu0 0.0
        %940 = vmatprep.subr.mxu0 0.0
        %941 = vmatpush2.xpose.msra.mxu0 0.0
        %942 = vmatprep.subr.mxu0 0.0
        %943 = vmatpush2.xpose.msra.mxu0 0.0
        %944 = vmatprep.subr.mxu0 0.0
        %945 = vmatpush2.xpose.msra.mxu0 0.0
        %946 = vmatprep.subr.mxu0 0.0
        %947 = vmatpush2.xpose.msra.mxu0 0.0
        %948 = vmatprep.subr.mxu0 0.0
        %949 = vmatpush2.xpose.msra.mxu0 0.0
        %950 = vmatprep.subr.mxu0 0.0
        %951 = vmatpush2.xpose.msra.mxu0 0.0
        %952 = vmatprep.subr.mxu0 0.0
        %953 = vmatpush2.xpose.msra.mxu0 0.0
        %954 = vmatprep.subr.mxu0 0.0
        %955 = vmatpush2.xpose.msra.mxu0 0.0
        %956 = vmatprep.mubr.f32.mxu0 0.0
        %957 = vmatmul.mubr.f32.gmra.mxu0 %v888
        %v958 = vpop.f32.mrf.mxu0
        %v959 = vadd.f32 0.0, %v958
        %v960 = vpop.f32.mrf.mxu0
        %961 = vdwg.mxu0
        %962 = vrot.lane.b32.xlu0 %v806, 96
        %v963 = vpop.permute.xlu0 %962
        %v964 = vsel %vm811, %v799, 0
        %v966 = vsel %vm811, %v963, 0
        %968 = vmatprep.subr.mxu0 0.0
        %969 = vmatpush1.xpose.msra.mxu0 0.0
        %970 = vmatprep.subr.mxu0 0.0
        %971 = vmatpush1.xpose.msra.mxu0 0.0
        %972 = vmatprep.subr.mxu0 0.0
        %973 = vmatpush1.xpose.msra.mxu0 0.0
        %974 = vmatprep.subr.mxu0 0.0
        %975 = vmatpush1.xpose.msra.mxu0 0.0
        %976 = vmatprep.subr.mxu0 0.0
        %977 = vmatpush1.xpose.msra.mxu0 0.0
        %978 = vmatprep.subr.mxu0 0.0
        %979 = vmatpush1.xpose.msra.mxu0 0.0
        %980 = vmatprep.subr.mxu0 0.0
        %981 = vmatpush1.xpose.msra.mxu0 0.0
        %982 = vmatprep.subr.mxu0 0.0
        %983 = vmatpush1.xpose.msra.mxu0 0.0
        %984 = vmatprep.subr.mxu0 0.0
        %985 = vmatpush1.xpose.msra.mxu0 0.0
        %986 = vmatprep.subr.mxu0 0.0
        %987 = vmatpush1.xpose.msra.mxu0 0.0
        %988 = vmatprep.subr.mxu0 0.0
        %989 = vmatpush1.xpose.msra.mxu0 0.0
        %990 = vmatprep.subr.mxu0 0.0
        %991 = vmatpush1.xpose.msra.mxu0 0.0
        %992 = vmatprep.subr.mxu0 0.0
        %993 = vmatpush1.xpose.msra.mxu0 0.0
        %994 = vmatprep.subr.mxu0 0.0
        %995 = vmatpush1.xpose.msra.mxu0 0.0
        %996 = vmatprep.subr.mxu0 0.0
        %997 = vmatpush1.xpose.msra.mxu0 0.0
        %998 = vmatprep.subr.mxu0 0.0
        %999 = vmatpush1.xpose.msra.mxu0 %v966
        %1000 = vmatprep.subr.mxu0 0.0
        %1001 = vmatpush2.xpose.msra.mxu0 0.0
        %1002 = vmatprep.subr.mxu0 0.0
        %1003 = vmatpush2.xpose.msra.mxu0 0.0
        %1004 = vmatprep.subr.mxu0 0.0
        %1005 = vmatpush2.xpose.msra.mxu0 0.0
        %1006 = vmatprep.subr.mxu0 0.0
        %1007 = vmatpush2.xpose.msra.mxu0 0.0
        %1008 = vmatprep.subr.mxu0 0.0
        %1009 = vmatpush2.xpose.msra.mxu0 0.0
        %1010 = vmatprep.subr.mxu0 0.0
        %1011 = vmatpush2.xpose.msra.mxu0 0.0
        %1012 = vmatprep.subr.mxu0 0.0
        %1013 = vmatpush2.xpose.msra.mxu0 0.0
        %1014 = vmatprep.subr.mxu0 0.0
        %1015 = vmatpush2.xpose.msra.mxu0 0.0
        %1016 = vmatprep.subr.mxu0 0.0
        %1017 = vmatpush2.xpose.msra.mxu0 0.0
        %1018 = vmatprep.subr.mxu0 0.0
        %1019 = vmatpush2.xpose.msra.mxu0 0.0
        %1020 = vmatprep.subr.mxu0 0.0
        %1021 = vmatpush2.xpose.msra.mxu0 0.0
        %1022 = vmatprep.subr.mxu0 0.0
        %1023 = vmatpush2.xpose.msra.mxu0 0.0
        %1024 = vmatprep.subr.mxu0 0.0
        %1025 = vmatpush2.xpose.msra.mxu0 0.0
        %1026 = vmatprep.subr.mxu0 0.0
        %1027 = vmatpush2.xpose.msra.mxu0 0.0
        %1028 = vmatprep.subr.mxu0 0.0
        %1029 = vmatpush2.xpose.msra.mxu0 0.0
        %1030 = vmatprep.subr.mxu0 0.0
        %1031 = vmatpush2.xpose.msra.mxu0 0.0
        %1032 = vmatprep.mubr.f32.mxu0 0.0
        %1033 = vmatmul.mubr.f32.gmra.mxu0 %v964
        %v1034 = vpop.f32.mrf.mxu0
        %v1035 = vadd.f32 0.0, %v1034
        %v1036 = vpop.f32.mrf.mxu0
        %1037 = vdwg.mxu0
        %1038 = vrot.lane.b32.xlu0 %v808, 96
        %v1039 = vpop.permute.xlu0 %1038
        %v1040 = vsel %vm811, %v801, 0
        %v1042 = vsel %vm811, %v1039, 0
        %1044 = vmatprep.subr.mxu0 0.0
        %1045 = vmatpush1.xpose.msra.mxu0 0.0
        %1046 = vmatprep.subr.mxu0 0.0
        %1047 = vmatpush1.xpose.msra.mxu0 0.0
        %1048 = vmatprep.subr.mxu0 0.0
        %1049 = vmatpush1.xpose.msra.mxu0 0.0
        %1050 = vmatprep.subr.mxu0 0.0
        %1051 = vmatpush1.xpose.msra.mxu0 0.0
        %1052 = vmatprep.subr.mxu0 0.0
        %1053 = vmatpush1.xpose.msra.mxu0 0.0
        %1054 = vmatprep.subr.mxu0 0.0
        %1055 = vmatpush1.xpose.msra.mxu0 0.0
        %1056 = vmatprep.subr.mxu0 0.0
        %1057 = vmatpush1.xpose.msra.mxu0 0.0
        %1058 = vmatprep.subr.mxu0 0.0
        %1059 = vmatpush1.xpose.msra.mxu0 0.0
        %1060 = vmatprep.subr.mxu0 0.0
        %1061 = vmatpush1.xpose.msra.mxu0 0.0
        %1062 = vmatprep.subr.mxu0 0.0
        %1063 = vmatpush1.xpose.msra.mxu0 0.0
        %1064 = vmatprep.subr.mxu0 0.0
        %1065 = vmatpush1.xpose.msra.mxu0 0.0
        %1066 = vmatprep.subr.mxu0 0.0
        %1067 = vmatpush1.xpose.msra.mxu0 0.0
        %1068 = vmatprep.subr.mxu0 0.0
        %1069 = vmatpush1.xpose.msra.mxu0 0.0
        %1070 = vmatprep.subr.mxu0 0.0
        %1071 = vmatpush1.xpose.msra.mxu0 0.0
        %1072 = vmatprep.subr.mxu0 0.0
        %1073 = vmatpush1.xpose.msra.mxu0 0.0
        %1074 = vmatprep.subr.mxu0 0.0
        %1075 = vmatpush1.xpose.msra.mxu0 %v1042
        %1076 = vmatprep.subr.mxu0 0.0
        %1077 = vmatpush2.xpose.msra.mxu0 0.0
        %1078 = vmatprep.subr.mxu0 0.0
        %1079 = vmatpush2.xpose.msra.mxu0 0.0
        %1080 = vmatprep.subr.mxu0 0.0
        %1081 = vmatpush2.xpose.msra.mxu0 0.0
        %1082 = vmatprep.subr.mxu0 0.0
        %1083 = vmatpush2.xpose.msra.mxu0 0.0
        %1084 = vmatprep.subr.mxu0 0.0
        %1085 = vmatpush2.xpose.msra.mxu0 0.0
        %1086 = vmatprep.subr.mxu0 0.0
        %1087 = vmatpush2.xpose.msra.mxu0 0.0
        %1088 = vmatprep.subr.mxu0 0.0
        %1089 = vmatpush2.xpose.msra.mxu0 0.0
        %1090 = vmatprep.subr.mxu0 0.0
        %1091 = vmatpush2.xpose.msra.mxu0 0.0
        %1092 = vmatprep.subr.mxu0 0.0
        %1093 = vmatpush2.xpose.msra.mxu0 0.0
        %1094 = vmatprep.subr.mxu0 0.0
        %1095 = vmatpush2.xpose.msra.mxu0 0.0
        %1096 = vmatprep.subr.mxu0 0.0
        %1097 = vmatpush2.xpose.msra.mxu0 0.0
        %1098 = vmatprep.subr.mxu0 0.0
        %1099 = vmatpush2.xpose.msra.mxu0 0.0
        %1100 = vmatprep.subr.mxu0 0.0
        %1101 = vmatpush2.xpose.msra.mxu0 0.0
        %1102 = vmatprep.subr.mxu0 0.0
        %1103 = vmatpush2.xpose.msra.mxu0 0.0
        %1104 = vmatprep.subr.mxu0 0.0
        %1105 = vmatpush2.xpose.msra.mxu0 0.0
        %1106 = vmatprep.subr.mxu0 0.0
        %1107 = vmatpush2.xpose.msra.mxu0 0.0
        %1108 = vmatprep.mubr.f32.mxu0 0.0
        %1109 = vmatmul.mubr.f32.gmra.mxu0 %v1040
        %v1110 = vpop.f32.mrf.mxu0
        %v1111 = vadd.f32 0.0, %v1110
        %v1112 = vpop.f32.mrf.mxu0
        %1113 = vdwg.mxu0
        %v1114 = vsel %vm811, %v883, -inf
        %1115 = vmax.xlane.f32.xlu0 %v1114
        %v1116 = vpop.xlane.xlu0 %1115
        %v1117 = vsel %vm811, %v959, -inf
        %1118 = vmax.xlane.f32.xlu0 %v1117
        %v1119 = vpop.xlane.xlu0 %1118
        %v1120 = vsel %vm811, %v1035, -inf
        %1121 = vmax.xlane.f32.xlu0 %v1120
        %v1122 = vpop.xlane.xlu0 %1121
        %v1123 = vsel %vm811, %v1111, -inf
        %1124 = vmax.xlane.f32.xlu0 %v1123
        %v1125 = vpop.xlane.xlu0 %1124
        %v1126 = vsub.f32 %v883, %v1116
        %v1127 = vsub.f32 %v959, %v1119
        %v1128 = vsub.f32 %v1035, %v1122
        %v1129 = vsub.f32 %v1111, %v1125
        %v1130 = vmul.f32 %v1126, 1.442695
        %v1131 = vpow.pop %v1130
        %v1132 = vmul.f32 %v1127, 1.442695
        %v1133 = vpow.pop %v1132
        %v1134 = vmul.f32 %v1128, 1.442695
        %v1135 = vpow.pop %v1134
        %v1136 = vmul.f32 %v1129, 1.442695
        %v1137 = vpow.pop %v1136
        %v1138 = vsel %vm811, %v1131, 0.0
        %1139 = vadd.xlane.f32.xlu0 %v1138
        %v1140 = vpop.xlane.xlu0 %1139
        %v1141 = vsel %vm811, %v1133, 0.0
        %1142 = vadd.xlane.f32.xlu0 %v1141
        %v1143 = vpop.xlane.xlu0 %1142
        %v1144 = vsel %vm811, %v1135, 0.0
        %1145 = vadd.xlane.f32.xlu0 %v1144
        %v1146 = vpop.xlane.xlu0 %1145
        %v1147 = vsel %vm811, %v1137, 0.0
        %1148 = vadd.xlane.f32.xlu0 %v1147
        %v1149 = vpop.xlane.xlu0 %1148
        %v1150 = vrcp.pop %v1140
        %v1151 = vrcp.pop %v1143
        %v1152 = vrcp.pop %v1146
        %v1153 = vrcp.pop %v1149
        %v1154 = vmul.f32 %v1140, %v1150
        %v1155 = vmul.f32 %v1143, %v1151
        %v1156 = vmul.f32 %v1146, %v1152
        %v1157 = vmul.f32 %v1149, %v1153
        %v1158 = vsub.f32 2.0, %v1154
        %v1159 = vsub.f32 2.0, %v1155
        %v1160 = vsub.f32 2.0, %v1156
        %v1161 = vsub.f32 2.0, %v1157
        %v1162 = vmul.f32 %v1150, %v1158
        %v1163 = vmul.f32 %v1151, %v1159
        %v1164 = vmul.f32 %v1152, %v1160
        %v1165 = vmul.f32 %v1153, %v1161
        %v1166 = vmul.f32 %v1131, %v1162
        %v1167 = vmul.f32 %v1133, %v1163
        %v1168 = vmul.f32 %v1135, %v1164
        %v1169 = vmul.f32 %v1137, %v1165
        %1170 = vrot.lane.b32.xlu0 %v793, 64
        %v1171 = vpop.permute.xlu0 %1170
        %v1174 = vsel %vm811, %v1166, 0
        %1176 = vmatprep.subr.mxu0 0.0
        %1177 = vmatpush1.msra.mxu0 0.0
        %1178 = vmatprep.subr.mxu0 0.0
        %1179 = vmatpush1.msra.mxu0 0.0
        %1180 = vmatprep.subr.mxu0 0.0
        %1181 = vmatpush1.msra.mxu0 0.0
        %1182 = vmatprep.subr.mxu0 0.0
        %1183 = vmatpush1.msra.mxu0 0.0
        %1184 = vmatprep.subr.mxu0 0.0
        %1185 = vmatpush1.msra.mxu0 0.0
        %1186 = vmatprep.subr.mxu0 0.0
        %1187 = vmatpush1.msra.mxu0 0.0
        %1188 = vmatprep.subr.mxu0 0.0
        %1189 = vmatpush1.msra.mxu0 0.0
        %1190 = vmatprep.subr.mxu0 0.0
        %1191 = vmatpush1.msra.mxu0 0.0
        %1192 = vmatprep.subr.mxu0 0.0
        %1193 = vmatpush1.msra.mxu0 0.0
        %1194 = vmatprep.subr.mxu0 0.0
        %1195 = vmatpush1.msra.mxu0 0.0
        %1196 = vmatprep.subr.mxu0 0.0
        %1197 = vmatpush1.msra.mxu0 0.0
        %1198 = vmatprep.subr.mxu0 0.0
        %1199 = vmatpush1.msra.mxu0 0.0
        %1200 = vmatprep.subr.mxu0 0.0
        %1201 = vmatpush1.msra.mxu0 0.0
        %1202 = vmatprep.subr.mxu0 0.0
        %1203 = vmatpush1.msra.mxu0 0.0
        %1204 = vmatprep.subr.mxu0 0.0
        %1205 = vmatpush1.msra.mxu0 0.0
        %1206 = vmatprep.subr.mxu0 0.0
        %1207 = vmatpush1.msra.mxu0 %v1171
        %1208 = vmatprep.subr.mxu0 0.0
        %1209 = vmatpush2.msra.mxu0 0.0
        %1210 = vmatprep.subr.mxu0 0.0
        %1211 = vmatpush2.msra.mxu0 0.0
        %1212 = vmatprep.subr.mxu0 0.0
        %1213 = vmatpush2.msra.mxu0 0.0
        %1214 = vmatprep.subr.mxu0 0.0
        %1215 = vmatpush2.msra.mxu0 0.0
        %1216 = vmatprep.subr.mxu0 0.0
        %1217 = vmatpush2.msra.mxu0 0.0
        %1218 = vmatprep.subr.mxu0 0.0
        %1219 = vmatpush2.msra.mxu0 0.0
        %1220 = vmatprep.subr.mxu0 0.0
        %1221 = vmatpush2.msra.mxu0 0.0
        %1222 = vmatprep.subr.mxu0 0.0
        %1223 = vmatpush2.msra.mxu0 0.0
        %1224 = vmatprep.subr.mxu0 0.0
        %1225 = vmatpush2.msra.mxu0 0.0
        %1226 = vmatprep.subr.mxu0 0.0
        %1227 = vmatpush2.msra.mxu0 0.0
        %1228 = vmatprep.subr.mxu0 0.0
        %1229 = vmatpush2.msra.mxu0 0.0
        %1230 = vmatprep.subr.mxu0 0.0
        %1231 = vmatpush2.msra.mxu0 0.0
        %1232 = vmatprep.subr.mxu0 0.0
        %1233 = vmatpush2.msra.mxu0 0.0
        %1234 = vmatprep.subr.mxu0 0.0
        %1235 = vmatpush2.msra.mxu0 0.0
        %1236 = vmatprep.subr.mxu0 0.0
        %1237 = vmatpush2.msra.mxu0 0.0
        %1238 = vmatprep.subr.mxu0 0.0
        %1239 = vmatpush2.msra.mxu0 0.0
        %1240 = vmatprep.mubr.f32.mxu0 0.0
        %1241 = vmatmul.mubr.f32.gmra.mxu0 %v1174
        %v1242 = vpop.f32.mrf.mxu0
        %v1243 = vadd.f32 0.0, %v1242
        %v1244 = vpop.f32.mrf.mxu0
        %1245 = vdwg.mxu0
        %1246 = vrot.lane.b32.xlu0 %v804, 64
        %v1247 = vpop.permute.xlu0 %1246
        %v1250 = vsel %vm811, %v1167, 0
        %1252 = vmatprep.subr.mxu0 0.0
        %1253 = vmatpush1.msra.mxu0 0.0
        %1254 = vmatprep.subr.mxu0 0.0
        %1255 = vmatpush1.msra.mxu0 0.0
        %1256 = vmatprep.subr.mxu0 0.0
        %1257 = vmatpush1.msra.mxu0 0.0
        %1258 = vmatprep.subr.mxu0 0.0
        %1259 = vmatpush1.msra.mxu0 0.0
        %1260 = vmatprep.subr.mxu0 0.0
        %1261 = vmatpush1.msra.mxu0 0.0
        %1262 = vmatprep.subr.mxu0 0.0
        %1263 = vmatpush1.msra.mxu0 0.0
        %1264 = vmatprep.subr.mxu0 0.0
        %1265 = vmatpush1.msra.mxu0 0.0
        %1266 = vmatprep.subr.mxu0 0.0
        %1267 = vmatpush1.msra.mxu0 0.0
        %1268 = vmatprep.subr.mxu0 0.0
        %1269 = vmatpush1.msra.mxu0 0.0
        %1270 = vmatprep.subr.mxu0 0.0
        %1271 = vmatpush1.msra.mxu0 0.0
        %1272 = vmatprep.subr.mxu0 0.0
        %1273 = vmatpush1.msra.mxu0 0.0
        %1274 = vmatprep.subr.mxu0 0.0
        %1275 = vmatpush1.msra.mxu0 0.0
        %1276 = vmatprep.subr.mxu0 0.0
        %1277 = vmatpush1.msra.mxu0 0.0
        %1278 = vmatprep.subr.mxu0 0.0
        %1279 = vmatpush1.msra.mxu0 0.0
        %1280 = vmatprep.subr.mxu0 0.0
        %1281 = vmatpush1.msra.mxu0 0.0
        %1282 = vmatprep.subr.mxu0 0.0
        %1283 = vmatpush1.msra.mxu0 %v1247
        %1284 = vmatprep.subr.mxu0 0.0
        %1285 = vmatpush2.msra.mxu0 0.0
        %1286 = vmatprep.subr.mxu0 0.0
        %1287 = vmatpush2.msra.mxu0 0.0
        %1288 = vmatprep.subr.mxu0 0.0
        %1289 = vmatpush2.msra.mxu0 0.0
        %1290 = vmatprep.subr.mxu0 0.0
        %1291 = vmatpush2.msra.mxu0 0.0
        %1292 = vmatprep.subr.mxu0 0.0
        %1293 = vmatpush2.msra.mxu0 0.0
        %1294 = vmatprep.subr.mxu0 0.0
        %1295 = vmatpush2.msra.mxu0 0.0
        %1296 = vmatprep.subr.mxu0 0.0
        %1297 = vmatpush2.msra.mxu0 0.0
        %1298 = vmatprep.subr.mxu0 0.0
        %1299 = vmatpush2.msra.mxu0 0.0
        %1300 = vmatprep.subr.mxu0 0.0
        %1301 = vmatpush2.msra.mxu0 0.0
        %1302 = vmatprep.subr.mxu0 0.0
        %1303 = vmatpush2.msra.mxu0 0.0
        %1304 = vmatprep.subr.mxu0 0.0
        %1305 = vmatpush2.msra.mxu0 0.0
        %1306 = vmatprep.subr.mxu0 0.0
        %1307 = vmatpush2.msra.mxu0 0.0
        %1308 = vmatprep.subr.mxu0 0.0
        %1309 = vmatpush2.msra.mxu0 0.0
        %1310 = vmatprep.subr.mxu0 0.0
        %1311 = vmatpush2.msra.mxu0 0.0
        %1312 = vmatprep.subr.mxu0 0.0
        %1313 = vmatpush2.msra.mxu0 0.0
        %1314 = vmatprep.subr.mxu0 0.0
        %1315 = vmatpush2.msra.mxu0 0.0
        %1316 = vmatprep.mubr.f32.mxu0 0.0
        %1317 = vmatmul.mubr.f32.gmra.mxu0 %v1250
        %v1318 = vpop.f32.mrf.mxu0
        %v1319 = vadd.f32 0.0, %v1318
        %v1320 = vpop.f32.mrf.mxu0
        %1321 = vdwg.mxu0
        %1322 = vrot.lane.b32.xlu0 %v806, 64
        %v1323 = vpop.permute.xlu0 %1322
        %v1326 = vsel %vm811, %v1168, 0
        %1328 = vmatprep.subr.mxu0 0.0
        %1329 = vmatpush1.msra.mxu0 0.0
        %1330 = vmatprep.subr.mxu0 0.0
        %1331 = vmatpush1.msra.mxu0 0.0
        %1332 = vmatprep.subr.mxu0 0.0
        %1333 = vmatpush1.msra.mxu0 0.0
        %1334 = vmatprep.subr.mxu0 0.0
        %1335 = vmatpush1.msra.mxu0 0.0
        %1336 = vmatprep.subr.mxu0 0.0
        %1337 = vmatpush1.msra.mxu0 0.0
        %1338 = vmatprep.subr.mxu0 0.0
        %1339 = vmatpush1.msra.mxu0 0.0
        %1340 = vmatprep.subr.mxu0 0.0
        %1341 = vmatpush1.msra.mxu0 0.0
        %1342 = vmatprep.subr.mxu0 0.0
        %1343 = vmatpush1.msra.mxu0 0.0
        %1344 = vmatprep.subr.mxu0 0.0
        %1345 = vmatpush1.msra.mxu0 0.0
        %1346 = vmatprep.subr.mxu0 0.0
        %1347 = vmatpush1.msra.mxu0 0.0
        %1348 = vmatprep.subr.mxu0 0.0
        %1349 = vmatpush1.msra.mxu0 0.0
        %1350 = vmatprep.subr.mxu0 0.0
        %1351 = vmatpush1.msra.mxu0 0.0
        %1352 = vmatprep.subr.mxu0 0.0
        %1353 = vmatpush1.msra.mxu0 0.0
        %1354 = vmatprep.subr.mxu0 0.0
        %1355 = vmatpush1.msra.mxu0 0.0
        %1356 = vmatprep.subr.mxu0 0.0
        %1357 = vmatpush1.msra.mxu0 0.0
        %1358 = vmatprep.subr.mxu0 0.0
        %1359 = vmatpush1.msra.mxu0 %v1323
        %1360 = vmatprep.subr.mxu0 0.0
        %1361 = vmatpush2.msra.mxu0 0.0
        %1362 = vmatprep.subr.mxu0 0.0
        %1363 = vmatpush2.msra.mxu0 0.0
        %1364 = vmatprep.subr.mxu0 0.0
        %1365 = vmatpush2.msra.mxu0 0.0
        %1366 = vmatprep.subr.mxu0 0.0
        %1367 = vmatpush2.msra.mxu0 0.0
        %1368 = vmatprep.subr.mxu0 0.0
        %1369 = vmatpush2.msra.mxu0 0.0
        %1370 = vmatprep.subr.mxu0 0.0
        %1371 = vmatpush2.msra.mxu0 0.0
        %1372 = vmatprep.subr.mxu0 0.0
        %1373 = vmatpush2.msra.mxu0 0.0
        %1374 = vmatprep.subr.mxu0 0.0
        %1375 = vmatpush2.msra.mxu0 0.0
        %1376 = vmatprep.subr.mxu0 0.0
        %1377 = vmatpush2.msra.mxu0 0.0
        %1378 = vmatprep.subr.mxu0 0.0
        %1379 = vmatpush2.msra.mxu0 0.0
        %1380 = vmatprep.subr.mxu0 0.0
        %1381 = vmatpush2.msra.mxu0 0.0
        %1382 = vmatprep.subr.mxu0 0.0
        %1383 = vmatpush2.msra.mxu0 0.0
        %1384 = vmatprep.subr.mxu0 0.0
        %1385 = vmatpush2.msra.mxu0 0.0
        %1386 = vmatprep.subr.mxu0 0.0
        %1387 = vmatpush2.msra.mxu0 0.0
        %1388 = vmatprep.subr.mxu0 0.0
        %1389 = vmatpush2.msra.mxu0 0.0
        %1390 = vmatprep.subr.mxu0 0.0
        %1391 = vmatpush2.msra.mxu0 0.0
        %1392 = vmatprep.mubr.f32.mxu0 0.0
        %1393 = vmatmul.mubr.f32.gmra.mxu0 %v1326
        %v1394 = vpop.f32.mrf.mxu0
        %v1395 = vadd.f32 0.0, %v1394
        %v1396 = vpop.f32.mrf.mxu0
        %1397 = vdwg.mxu0
        %1398 = vrot.lane.b32.xlu0 %v808, 64
        %v1399 = vpop.permute.xlu0 %1398
        %v1402 = vsel %vm811, %v1169, 0
        %1404 = vmatprep.subr.mxu0 0.0
        %1405 = vmatpush1.msra.mxu0 0.0
        %1406 = vmatprep.subr.mxu0 0.0
        %1407 = vmatpush1.msra.mxu0 0.0
        %1408 = vmatprep.subr.mxu0 0.0
        %1409 = vmatpush1.msra.mxu0 0.0
        %1410 = vmatprep.subr.mxu0 0.0
        %1411 = vmatpush1.msra.mxu0 0.0
        %1412 = vmatprep.subr.mxu0 0.0
        %1413 = vmatpush1.msra.mxu0 0.0
        %1414 = vmatprep.subr.mxu0 0.0
        %1415 = vmatpush1.msra.mxu0 0.0
        %1416 = vmatprep.subr.mxu0 0.0
        %1417 = vmatpush1.msra.mxu0 0.0
        %1418 = vmatprep.subr.mxu0 0.0
        %1419 = vmatpush1.msra.mxu0 0.0
        %1420 = vmatprep.subr.mxu0 0.0
        %1421 = vmatpush1.msra.mxu0 0.0
        %1422 = vmatprep.subr.mxu0 0.0
        %1423 = vmatpush1.msra.mxu0 0.0
        %1424 = vmatprep.subr.mxu0 0.0
        %1425 = vmatpush1.msra.mxu0 0.0
        %1426 = vmatprep.subr.mxu0 0.0
        %1427 = vmatpush1.msra.mxu0 0.0
        %1428 = vmatprep.subr.mxu0 0.0
        %1429 = vmatpush1.msra.mxu0 0.0
        %1430 = vmatprep.subr.mxu0 0.0
        %1431 = vmatpush1.msra.mxu0 0.0
        %1432 = vmatprep.subr.mxu0 0.0
        %1433 = vmatpush1.msra.mxu0 0.0
        %1434 = vmatprep.subr.mxu0 0.0
        %1435 = vmatpush1.msra.mxu0 %v1399
        %1436 = vmatprep.subr.mxu0 0.0
        %1437 = vmatpush2.msra.mxu0 0.0
        %1438 = vmatprep.subr.mxu0 0.0
        %1439 = vmatpush2.msra.mxu0 0.0
        %1440 = vmatprep.subr.mxu0 0.0
        %1441 = vmatpush2.msra.mxu0 0.0
        %1442 = vmatprep.subr.mxu0 0.0
        %1443 = vmatpush2.msra.mxu0 0.0
        %1444 = vmatprep.subr.mxu0 0.0
        %1445 = vmatpush2.msra.mxu0 0.0
        %1446 = vmatprep.subr.mxu0 0.0
        %1447 = vmatpush2.msra.mxu0 0.0
        %1448 = vmatprep.subr.mxu0 0.0
        %1449 = vmatpush2.msra.mxu0 0.0
        %1450 = vmatprep.subr.mxu0 0.0
        %1451 = vmatpush2.msra.mxu0 0.0
        %1452 = vmatprep.subr.mxu0 0.0
        %1453 = vmatpush2.msra.mxu0 0.0
        %1454 = vmatprep.subr.mxu0 0.0
        %1455 = vmatpush2.msra.mxu0 0.0
        %1456 = vmatprep.subr.mxu0 0.0
        %1457 = vmatpush2.msra.mxu0 0.0
        %1458 = vmatprep.subr.mxu0 0.0
        %1459 = vmatpush2.msra.mxu0 0.0
        %1460 = vmatprep.subr.mxu0 0.0
        %1461 = vmatpush2.msra.mxu0 0.0
        %1462 = vmatprep.subr.mxu0 0.0
        %1463 = vmatpush2.msra.mxu0 0.0
        %1464 = vmatprep.subr.mxu0 0.0
        %1465 = vmatpush2.msra.mxu0 0.0
        %1466 = vmatprep.subr.mxu0 0.0
        %1467 = vmatpush2.msra.mxu0 0.0
        %1468 = vmatprep.mubr.f32.mxu0 0.0
        %1469 = vmatmul.mubr.f32.gmra.mxu0 %v1402
        %v1470 = vpop.f32.mrf.mxu0
        %v1471 = vadd.f32 0.0, %v1470
        %v1472 = vpop.f32.mrf.mxu0
        %1473 = vdwg.mxu0
        %1475 = vrot.lane.b32.xlu0 %v1319, 8
        %v1476 = vpop.permute.xlu0 %1475
        %1479 = vrot.lane.b32.xlu0 %v1395, 16
        %v1480 = vpop.permute.xlu0 %1479
        %1483 = vrot.lane.b32.xlu0 %v1471, 24
        %v1484 = vpop.permute.xlu0 %1483
        %v1486 = vsel %vm811, %v1243, %v1476
        %vm1487 = vcmask 130048
        %v1488 = vsel %vm1487, %v1486, %v1480
        %vm1489 = vcmask 195584
        %v1490 = vsel %vm1489, %v1488, %v1484
        %v1491 = vld [vmem:[%s6] sm:$0xff]
        %v1492 = vld [vmem:[%s6 + $0x8] sm:$0xff]
        %v1493 = vld [vmem:[%s6 + $0x10] sm:$0xff]
        %v1494 = vld [vmem:[%s6 + $0x18] sm:$0xff]
        %v1495 = vld [vmem:[%s7] sm:$0x1]
        %v1497 = vlaneseq
        %v1498 = vshrl.u32 %v1497, 7
        %v1499 = vsub.s32 0, %v1498
        %v1500 = vrot.slane %v1495, %v1499
        %v1503 = vsel %vm554, %v1490, 0
        %1505 = vmatprep.subr.mxu0 0.0
        %1506 = vmatpush1.msra.mxu0 0.0
        %1507 = vmatprep.subr.mxu0 0.0
        %1508 = vmatpush1.msra.mxu0 0.0
        %1509 = vmatprep.subr.mxu0 0.0
        %1510 = vmatpush1.msra.mxu0 0.0
        %1511 = vmatprep.subr.mxu0 0.0
        %1512 = vmatpush1.msra.mxu0 0.0
        %1513 = vmatprep.subr.mxu0 0.0
        %1514 = vmatpush1.msra.mxu0 0.0
        %1515 = vmatprep.subr.mxu0 0.0
        %1516 = vmatpush1.msra.mxu0 0.0
        %1517 = vmatprep.subr.mxu0 0.0
        %1518 = vmatpush1.msra.mxu0 0.0
        %1519 = vmatprep.subr.mxu0 0.0
        %1520 = vmatpush1.msra.mxu0 0.0
        %1521 = vmatprep.subr.mxu0 0.0
        %1522 = vmatpush1.msra.mxu0 0.0
        %1523 = vmatprep.subr.mxu0 0.0
        %1524 = vmatpush1.msra.mxu0 0.0
        %1525 = vmatprep.subr.mxu0 0.0
        %1526 = vmatpush1.msra.mxu0 0.0
        %1527 = vmatprep.subr.mxu0 0.0
        %1528 = vmatpush1.msra.mxu0 0.0
        %1529 = vmatprep.subr.mxu0 0.0
        %1530 = vmatpush1.msra.mxu0 %v1494
        %1531 = vmatprep.subr.mxu0 0.0
        %1532 = vmatpush1.msra.mxu0 %v1493
        %1533 = vmatprep.subr.mxu0 0.0
        %1534 = vmatpush1.msra.mxu0 %v1492
        %1535 = vmatprep.subr.mxu0 0.0
        %1536 = vmatpush1.msra.mxu0 %v1491
        %1537 = vmatprep.subr.mxu0 0.0
        %1538 = vmatpush2.msra.mxu0 0.0
        %1539 = vmatprep.subr.mxu0 0.0
        %1540 = vmatpush2.msra.mxu0 0.0
        %1541 = vmatprep.subr.mxu0 0.0
        %1542 = vmatpush2.msra.mxu0 0.0
        %1543 = vmatprep.subr.mxu0 0.0
        %1544 = vmatpush2.msra.mxu0 0.0
        %1545 = vmatprep.subr.mxu0 0.0
        %1546 = vmatpush2.msra.mxu0 0.0
        %1547 = vmatprep.subr.mxu0 0.0
        %1548 = vmatpush2.msra.mxu0 0.0
        %1549 = vmatprep.subr.mxu0 0.0
        %1550 = vmatpush2.msra.mxu0 0.0
        %1551 = vmatprep.subr.mxu0 0.0
        %1552 = vmatpush2.msra.mxu0 0.0
        %1553 = vmatprep.subr.mxu0 0.0
        %1554 = vmatpush2.msra.mxu0 0.0
        %1555 = vmatprep.subr.mxu0 0.0
        %1556 = vmatpush2.msra.mxu0 0.0
        %1557 = vmatprep.subr.mxu0 0.0
        %1558 = vmatpush2.msra.mxu0 0.0
        %1559 = vmatprep.subr.mxu0 0.0
        %1560 = vmatpush2.msra.mxu0 0.0
        %1561 = vmatprep.subr.mxu0 0.0
        %1562 = vmatpush2.msra.mxu0 0.0
        %1563 = vmatprep.subr.mxu0 0.0
        %1564 = vmatpush2.msra.mxu0 0.0
        %1565 = vmatprep.subr.mxu0 0.0
        %1566 = vmatpush2.msra.mxu0 0.0
        %1567 = vmatprep.subr.mxu0 0.0
        %1568 = vmatpush2.msra.mxu0 0.0
        %1569 = vmatprep.mubr.f32.mxu0 0.0
        %1570 = vmatmul.mubr.f32.gmra.mxu0 %v1503
        %v1571 = vpop.f32.mrf.mxu0
        %v1572 = vadd.f32 %v1500, %v1571
        %v1573 = vpop.f32.mrf.mxu0
        %1574 = vdwg.mxu0
        %v1575 = vadd.f32 %v551, %v1572
        %v1576 = vld [vmem:[%s8] sm:$0x1]
        %v1577 = vld [vmem:[%s9] sm:$0x1]
        %v1578 = vsel %vm554, %v1575, 0.0
        %1579 = vadd.xlane.f32.xlu0 %v1578
        %v1580 = vpop.xlane.xlu0 %1579
        %v1581 = vmul.f32 %v1580, %v558
        %v1582 = vsub.f32 %v1575, %v1581
        %v1583 = vmul.f32 %v1582, %v1582
        %v1584 = vsel %vm554, %v1583, 0.0
        %1585 = vadd.xlane.f32.xlu0 %v1584
        %v1586 = vpop.xlane.xlu0 %1585
        %v1587 = vmul.f32 %v1586, %v558
        %v1588 = vadd.f32 %v1587, 1e-05
        %v1589 = vrsqrt.pop %v1588
        %v1590 = vmul.f32 %v1582, %v1589
        %v1592 = vlaneseq
        %v1593 = vshrl.u32 %v1592, 7
        %v1594 = vsub.s32 0, %v1593
        %v1595 = vrot.slane %v1576, %v1594
        %v1597 = vmul.f32 %v1590, %v1595
        %v1599 = vlaneseq
        %v1600 = vshrl.u32 %v1599, 7
        %v1601 = vsub.s32 0, %v1600
        %v1602 = vrot.slane %v1577, %v1601
        %v1604 = vadd.f32 %v1597, %v1602
        %v1605 = vld [vmem:[%s10] sm:$0xff]
        %v1606 = vld [vmem:[%s10 + $0x8] sm:$0xff]
        %v1607 = vld [vmem:[%s10 + $0x10] sm:$0xff]
        %v1608 = vld [vmem:[%s10 + $0x18] sm:$0xff]
        %v1609 = vld [vmem:[%s11] sm:$0x1]
        %v1611 = vlaneseq
        %v1612 = vshrl.u32 %v1611, 7
        %v1613 = vsub.s32 0, %v1612
        %v1614 = vrot.slane %v1609, %v1613
        %v1617 = vsel %vm554, %v1604, 0
        %1619 = vmatprep.subr.mxu0 0.0
        %1620 = vmatpush1.msra.mxu0 0.0
        %1621 = vmatprep.subr.mxu0 0.0
        %1622 = vmatpush1.msra.mxu0 0.0
        %1623 = vmatprep.subr.mxu0 0.0
        %1624 = vmatpush1.msra.mxu0 0.0
        %1625 = vmatprep.subr.mxu0 0.0
        %1626 = vmatpush1.msra.mxu0 0.0
        %1627 = vmatprep.subr.mxu0 0.0
        %1628 = vmatpush1.msra.mxu0 0.0
        %1629 = vmatprep.subr.mxu0 0.0
        %1630 = vmatpush1.msra.mxu0 0.0
        %1631 = vmatprep.subr.mxu0 0.0
        %1632 = vmatpush1.msra.mxu0 0.0
        %1633 = vmatprep.subr.mxu0 0.0
        %1634 = vmatpush1.msra.mxu0 0.0
        %1635 = vmatprep.subr.mxu0 0.0
        %1636 = vmatpush1.msra.mxu0 0.0
        %1637 = vmatprep.subr.mxu0 0.0
        %1638 = vmatpush1.msra.mxu0 0.0
        %1639 = vmatprep.subr.mxu0 0.0
        %1640 = vmatpush1.msra.mxu0 0.0
        %1641 = vmatprep.subr.mxu0 0.0
        %1642 = vmatpush1.msra.mxu0 0.0
        %1643 = vmatprep.subr.mxu0 0.0
        %1644 = vmatpush1.msra.mxu0 %v1608
        %1645 = vmatprep.subr.mxu0 0.0
        %1646 = vmatpush1.msra.mxu0 %v1607
        %1647 = vmatprep.subr.mxu0 0.0
        %1648 = vmatpush1.msra.mxu0 %v1606
        %1649 = vmatprep.subr.mxu0 0.0
        %1650 = vmatpush1.msra.mxu0 %v1605
        %1651 = vmatprep.subr.mxu0 0.0
        %1652 = vmatpush2.msra.mxu0 0.0
        %1653 = vmatprep.subr.mxu0 0.0
        %1654 = vmatpush2.msra.mxu0 0.0
        %1655 = vmatprep.subr.mxu0 0.0
        %1656 = vmatpush2.msra.mxu0 0.0
        %1657 = vmatprep.subr.mxu0 0.0
        %1658 = vmatpush2.msra.mxu0 0.0
        %1659 = vmatprep.subr.mxu0 0.0
        %1660 = vmatpush2.msra.mxu0 0.0
        %1661 = vmatprep.subr.mxu0 0.0
        %1662 = vmatpush2.msra.mxu0 0.0
        %1663 = vmatprep.subr.mxu0 0.0
        %1664 = vmatpush2.msra.mxu0 0.0
        %1665 = vmatprep.subr.mxu0 0.0
        %1666 = vmatpush2.msra.mxu0 0.0
        %1667 = vmatprep.subr.mxu0 0.0
        %1668 = vmatpush2.msra.mxu0 0.0
        %1669 = vmatprep.subr.mxu0 0.0
        %1670 = vmatpush2.msra.mxu0 0.0
        %1671 = vmatprep.subr.mxu0 0.0
        %1672 = vmatpush2.msra.mxu0 0.0
        %1673 = vmatprep.subr.mxu0 0.0
        %1674 = vmatpush2.msra.mxu0 0.0
        %1675 = vmatprep.subr.mxu0 0.0
        %1676 = vmatpush2.msra.mxu0 0.0
        %1677 = vmatprep.subr.mxu0 0.0
        %1678 = vmatpush2.msra.mxu0 0.0
        %1679 = vmatprep.subr.mxu0 0.0
        %1680 = vmatpush2.msra.mxu0 0.0
        %1681 = vmatprep.subr.mxu0 0.0
        %1682 = vmatpush2.msra.mxu0 0.0
        %1683 = vmatprep.mubr.f32.mxu0 0.0
        %1684 = vmatmul.mubr.f32.gmra.mxu0 %v1617
        %v1685 = vpop.f32.mrf.mxu0
        %v1686 = vadd.f32 %v1614, %v1685
        %v1687 = vpop.f32.mrf.mxu0
        %1688 = vdwg.mxu0
        %v1689 = vmul.f32 %v1686, 0.70710677
        %vm1690 = vcmp.ge.f32.partialorder %v1689, 0.0
        %v1691 = vsel %vm1690, 1.0, -1.0
        %v1692 = vand.u32 2147483647, %v1689
        %v1693 = vmul.f32 %v1692, 0.3275911
        %v1694 = vadd.f32 %v1693, 1.0
        %v1695 = vrcp.pop %v1694
        %v1696 = vmul.f32 1.0, %v1695
        %v1697 = vmul.f32 %v1696, 1.0614054
        %v1698 = vadd.f32 %v1697, -1.4531521
        %v1699 = vmul.f32 %v1696, %v1698
        %v1700 = vadd.f32 %v1699, 1.4214138
        %v1701 = vmul.f32 %v1696, %v1700
        %v1702 = vadd.f32 %v1701, -0.28449672
        %v1703 = vmul.f32 %v1696, %v1702
        %v1704 = vadd.f32 %v1703, 0.2548296
        %v1705 = vmul.f32 %v1696, %v1704
        %v1706 = vsub.f32 0.0, %v1692
        %v1707 = vmul.f32 %v1706, %v1692
        %v1708 = vmul.f32 %v1707, 1.442695
        %v1709 = vpow.pop %v1708
        %v1710 = vmul.f32 %v1705, %v1709
        %v1711 = vsub.f32 1.0, %v1710
        %v1712 = vmul.f32 %v1691, %v1711
        %v1713 = vmul.f32 %v1686, 0.5
        %v1714 = vadd.f32 %v1712, 1.0
        %v1715 = vmul.f32 %v1713, %v1714
        %v1716 = vld [vmem:[%s12] sm:$0xff]
        %v1717 = vld [vmem:[%s12 + $0x8] sm:$0xff]
        %v1718 = vld [vmem:[%s12 + $0x10] sm:$0xff]
        %v1719 = vld [vmem:[%s12 + $0x18] sm:$0xff]
        %v1720 = vld [vmem:[%s12 + $0x20] sm:$0xff]
        %v1721 = vld [vmem:[%s12 + $0x28] sm:$0xff]
        %v1722 = vld [vmem:[%s12 + $0x30] sm:$0xff]
        %v1723 = vld [vmem:[%s12 + $0x38] sm:$0xff]
        %v1724 = vld [vmem:[%s12 + $0x40] sm:$0xff]
        %v1725 = vld [vmem:[%s12 + $0x48] sm:$0xff]
        %v1726 = vld [vmem:[%s12 + $0x50] sm:$0xff]
        %v1727 = vld [vmem:[%s12 + $0x58] sm:$0xff]
        %v1728 = vld [vmem:[%s12 + $0x60] sm:$0xff]
        %v1729 = vld [vmem:[%s12 + $0x68] sm:$0xff]
        %v1730 = vld [vmem:[%s12 + $0x70] sm:$0xff]
        %v1731 = vld [vmem:[%s12 + $0x78] sm:$0xff]
        %v1732 = vld [vmem:[#allocation5] sm:$0x1]
        %v1734 = vlaneseq
        %v1735 = vshrl.u32 %v1734, 7
        %v1736 = vsub.s32 0, %v1735
        %v1737 = vrot.slane %v1732, %v1736
        %1739 = vmatprep.subr.mxu0 0.0
        %1740 = vmatpush1.msra.mxu0 %v1731
        %1741 = vmatprep.subr.mxu0 0.0
        %1742 = vmatpush1.msra.mxu0 %v1730
        %1743 = vmatprep.subr.mxu0 0.0
        %1744 = vmatpush1.msra.mxu0 %v1729
        %1745 = vmatprep.subr.mxu0 0.0
        %1746 = vmatpush1.msra.mxu0 %v1728
        %1747 = vmatprep.subr.mxu0 0.0
        %1748 = vmatpush1.msra.mxu0 %v1727
        %1749 = vmatprep.subr.mxu0 0.0
        %1750 = vmatpush1.msra.mxu0 %v1726
        %1751 = vmatprep.subr.mxu0 0.0
        %1752 = vmatpush1.msra.mxu0 %v1725
        %1753 = vmatprep.subr.mxu0 0.0
        %1754 = vmatpush1.msra.mxu0 %v1724
        %1755 = vmatprep.subr.mxu0 0.0
        %1756 = vmatpush1.msra.mxu0 %v1723
        %1757 = vmatprep.subr.mxu0 0.0
        %1758 = vmatpush1.msra.mxu0 %v1722
        %1759 = vmatprep.subr.mxu0 0.0
        %1760 = vmatpush1.msra.mxu0 %v1721
        %1761 = vmatprep.subr.mxu0 0.0
        %1762 = vmatpush1.msra.mxu0 %v1720
        %1763 = vmatprep.subr.mxu0 0.0
        %1764 = vmatpush1.msra.mxu0 %v1719
        %1765 = vmatprep.subr.mxu0 0.0
        %1766 = vmatpush1.msra.mxu0 %v1718
        %1767 = vmatprep.subr.mxu0 0.0
        %1768 = vmatpush1.msra.mxu0 %v1717
        %1769 = vmatprep.subr.mxu0 0.0
        %1770 = vmatpush1.msra.mxu0 %v1716
        %1771 = vmatprep.subr.mxu0 0.0
        %1772 = vmatpush2.msra.mxu0 0.0
        %1773 = vmatprep.subr.mxu0 0.0
        %1774 = vmatpush2.msra.mxu0 0.0
        %1775 = vmatprep.subr.mxu0 0.0
        %1776 = vmatpush2.msra.mxu0 0.0
        %1777 = vmatprep.subr.mxu0 0.0
        %1778 = vmatpush2.msra.mxu0 0.0
        %1779 = vmatprep.subr.mxu0 0.0
        %1780 = vmatpush2.msra.mxu0 0.0
        %1781 = vmatprep.subr.mxu0 0.0
        %1782 = vmatpush2.msra.mxu0 0.0
        %1783 = vmatprep.subr.mxu0 0.0
        %1784 = vmatpush2.msra.mxu0 0.0
        %1785 = vmatprep.subr.mxu0 0.0
        %1786 = vmatpush2.msra.mxu0 0.0
        %1787 = vmatprep.subr.mxu0 0.0
        %1788 = vmatpush2.msra.mxu0 0.0
        %1789 = vmatprep.subr.mxu0 0.0
        %1790 = vmatpush2.msra.mxu0 0.0
        %1791 = vmatprep.subr.mxu0 0.0
        %1792 = vmatpush2.msra.mxu0 0.0
        %1793 = vmatprep.subr.mxu0 0.0
        %1794 = vmatpush2.msra.mxu0 0.0
        %1795 = vmatprep.subr.mxu0 0.0
        %1796 = vmatpush2.msra.mxu0 0.0
        %1797 = vmatprep.subr.mxu0 0.0
        %1798 = vmatpush2.msra.mxu0 0.0
        %1799 = vmatprep.subr.mxu0 0.0
        %1800 = vmatpush2.msra.mxu0 0.0
        %1801 = vmatprep.subr.mxu0 0.0
        %1802 = vmatpush2.msra.mxu0 0.0
        %1803 = vmatprep.mubr.f32.mxu0 0.0
        %1804 = vmatmul.mubr.f32.gmra.mxu0 %v1715
        %v1805 = vpop.f32.mrf.mxu0
        %v1806 = vadd.f32 %v1737, %v1805
        %v1807 = vpop.f32.mrf.mxu0
        %1808 = vdwg.mxu0
        %v1809 = vadd.f32 %v1575, %v1806
        %1810 = vst.msk [vmem:[%s539] sm:$0xff] %vm554, %v1809
        %1811 = vst.msk [vmem:[%s546] sm:$0xff] %vm811, %v1166
        %1812 = vst.msk [vmem:[%s546 + $0x8] sm:$0xff] %vm811, %v1167
        %1813 = vst.msk [vmem:[%s546 + $0x10] sm:$0xff] %vm811, %v1168
        %1814 = vst.msk [vmem:[%s546 + $0x18] sm:$0xff] %vm811, %v1169
        %s1815 = sand.u32 %s349, 1
        %s1816 = scalar_lea.sflag [#allocation4], %s1815
        %s1817 = sand.u32 %s349, 1
        %s1818 = smul.addr %s1817, 8
        %s1819 = scalar_lea.vmem [#allocation7], %s1818
        %s1820 = sand.u32 %s375, 1
        %s1821 = scalar_lea.sflag [#allocation9], %s1820
        %s1822 = sand.u32 %s375, 1
        %s1823 = smul.addr %s1822, 32
        %s1824 = scalar_lea.vmem [#allocation8], %s1823
        // Predicated region
        $region85: #{tpu_custom_call.1} parent=75 // pred_check
          %p1825 = pneg %p359
        $region86: #{tpu_custom_call.1} parent=75 // pred_check_branch
          %1827 = sbr.rel (%p1825) target = $region88
        $region87: #{tpu_custom_call.1} parent=75 // pred_region
          %s1829 = ssub.s32 128, 128
          %1830 = vsyncadd %s1816, %s1829
          %s1831 = smul.addr %s37, 128
          %s1832 = scalar_lea.hbm %s14, %s1831
          %s1834 = sshll.u32 %s1819, 4
          %s1835 = int_to_ptr.vmem [resolvable:$true] %s1834
          %1837 = dma.vmem_to_hbm [thread:$0]  %s1835, 128, %s1832, %s1816
        $region88: #{tpu_custom_call.1} parent=75 // pred_fallthru
          _
        // Predicated region
        $region89: #{tpu_custom_call.1} parent=75 // pred_check
          %p1838 = pneg %p385
        $region90: #{tpu_custom_call.1} parent=75 // pred_check_branch
          %1840 = sbr.rel (%p1838) target = $region92
        $region91: #{tpu_custom_call.1} parent=75 // pred_region
          %s1842 = ssub.s32 512, 512
          %1843 = vsyncadd %s1821, %s1842
          %s1844 = smul.addr %s37, 4
          %s1845 = smul.addr %s1844, 128
          %s1846 = scalar_lea.hbm %s15, %s1845
          %s1847 = sshll.u32 %s1824, 4
          %s1848 = int_to_ptr.vmem [resolvable:$true] %s1847
          %1853 = dma.vmem_to_hbm [thread:$0]  %s1848, 512, %s1846, %s1821, 128, 128, 8
        $region92: #{tpu_custom_call.1} parent=75 // pred_fallthru
          _
      $region76: #{tpu_custom_call.1} parent=5 // pred_fallthru
        _
      %p1854 = scmp.le.s32.totalorder 2, %s32
      // Predicated region
      $region93: #{tpu_custom_call.1} parent=5 // pred_check
        %p1855 = pneg %p1854
      $region94: #{tpu_custom_call.1} parent=5 // pred_check_branch
        %1857 = sbr.rel (%p1855) target = $region96
      $region95: #{tpu_custom_call.1} parent=5 // pred_region
        %s1858 = ssub.s32 %s32, 2
        // Predicated region
        $region97: #{tpu_custom_call.1} parent=95 // pred_check
          %p1859 = pneg %p365
        $region98: #{tpu_custom_call.1} parent=95 // pred_check_branch
          %1861 = sbr.rel (%p1859) target = $region100
        $region99: #{tpu_custom_call.1} parent=95 // pred_region
          %s1862 = sand.u32 %s350, 1
          %s1863 = scalar_lea.sflag [#allocation4], %s1862
          %s1864 = sand.u32 %s350, 1
          %s1865 = smul.addr %s1864, 8
          %s1866 = scalar_lea.vmem [#allocation7], %s1865
          %1867 = dma.done %s1863, 128
        $region100: #{tpu_custom_call.1} parent=95 // pred_fallthru
          _
        // Predicated region
        $region101: #{tpu_custom_call.1} parent=95 // pred_check
          %p1868 = pneg %p391
        $region102: #{tpu_custom_call.1} parent=95 // pred_check_branch
          %1870 = sbr.rel (%p1868) target = $region104
        $region103: #{tpu_custom_call.1} parent=95 // pred_region
          %s1871 = sand.u32 %s376, 1
          %s1872 = scalar_lea.sflag [#allocation9], %s1871
          %s1873 = sand.u32 %s376, 1
          %s1874 = smul.addr %s1873, 32
          %s1875 = scalar_lea.vmem [#allocation8], %s1874
          %1876 = dma.done %s1872, 512
        $region104: #{tpu_custom_call.1} parent=95 // pred_fallthru
          _
      $region96: #{tpu_custom_call.1} parent=5 // pred_fallthru
        _
    $region6: #{tpu_custom_call.1} parent=1 // loop_footer
      %s36 = sadd.s32 1, %s32
    $region7: #{tpu_custom_call.1} parent=1 // loop_footer_branch
      %31 = sbr.rel target = $region3
    $region8: #{tpu_custom_call.1} parent=1 // loop_exit
      _
    %1877 = vsyncpa [#allocation3], 1
    %s1878 = scalar_lea.sflag [#allocation3], 1
    %1879 = vsyncpa %s1878, 1
    %1880 = vsyncpa [#allocation6], 1
    %1881 = vsyncpa [#allocation4], 1
    %s1882 = scalar_lea.sflag [#allocation4], 1
    %1883 = vsyncpa %s1882, 1
    %1884 = vsyncpa [#allocation9], 1
    %s1885 = scalar_lea.sflag [#allocation9], 1
    %1886 = vsyncpa %s1885, 1

</llo_original>
